<compile_context>
chip_gen: v6e
topology: v6e:2x2x1
jax: 0.10.0
libtpu: 0.0.40
codegen_flags: <defaults>
</compile_context>

<pallas_src>
import math
from functools import partial

import jax
import jax.numpy as jnp
from jax import lax
from jax.experimental import pallas as pl
from jax.experimental.pallas import tpu as pltpu


def _round_up(x, m):
    return -(-x // m) * m


def _l2normalize(v, eps=1e-12):
    return v / (jnp.linalg.norm(v) + eps)


def spectral_normalize_weight(weight, u, n_power_iterations=1):
    """Power iteration matching max_singular_value / SNConv2d.W_ (lower_bound=False)."""
    w_mat = weight.reshape(weight.shape[0], -1)     # (Cout, K)
    _u = u                                          # (1, Cout)
    for _ in range(n_power_iterations):
        _v = _l2normalize(_u @ w_mat)               # (1, K)
        _u = _l2normalize(_v @ w_mat.T)             # (1, Cout)
    sigma = jnp.sum((_u @ w_mat) * _v)
    sigma = lax.stop_gradient(sigma)                # torch uses W.data / no-grad buffer
    _u = lax.stop_gradient(_u)
    return weight / sigma, _u


def _conv_pack_kernel(x_ref, halo_ref, w_ref, b_ref, o_ref, a_ref, *, shifts, cin_pad):
    """One output tile:
         A[r, t*cin_pad:(t+1)*cin_pad] = x[r + shift_t, :]    (bf16, VMEM scratch)
         out = ReLU(bias + A @ W2d)                           (single MXU matmul)
    """
    block_m = o_ref.shape[0]
    # Current tile rows + halo rows (next hb rows of the same flat input), all bf16.
    xw = jnp.concatenate([x_ref[...], halo_ref[...]], axis=0)
    # Pack the k*k taps into the contraction dimension (static unroll over taps).
    for t, s in enumerate(shifts):
        a_ref[:, t * cin_pad:(t + 1) * cin_pad] = xw[s:s + block_m, :]
    acc = jnp.dot(a_ref[...], w_ref[...], preferred_element_type=jnp.float32)
    o_ref[...] = jnp.maximum(acc + b_ref[...], 0.0).astype(o_ref.dtype)


def conv_block_forward(x, weight, bias, u, *, kernel_size=3, stride=1,
                       block_m_cap=4096, nchw_output=True):
    """ConvBlock.forward: SNConv2d(x) -> ReLU.  x is NCHW (PyTorch layout)."""
    k = kernel_size
    pad = int(math.ceil((k - 1) / 2))
    N, Cin, H, W = x.shape
    Cout = weight.shape[0]
    Hout = (H + 2 * pad - k) // stride + 1
    Wout = (W + 2 * pad - k) // stride + 1

    w_bar, _ = spectral_normalize_weight(weight, u)

    cin_pad = _round_up(Cin, 8)        # per-tap channel group width in the packed K
    cout_pad = _round_up(Cout, 128)    # lane-dense output tiles (unmasked vst)
    kk = k * k
    K_total = kk * cin_pad             # packed MXU contraction depth

    # Weights: (Cout, Cin, k, k) -> 2-D (k*k*cin_pad, cout_pad), bf16.
    w_taps = jnp.transpose(w_bar, (2, 3, 1, 0)).reshape(kk, Cin, Cout)
    w_taps = jnp.pad(w_taps, ((0, 0), (0, cin_pad - Cin), (0, cout_pad - Cout)))
    w2d = w_taps.reshape(K_total, cout_pad).astype(jnp.bfloat16)
    bias2 = jnp.pad(bias.astype(jnp.float32), (0, cout_pad - Cout)).reshape(1, cout_pad)

    # Input: NCHW -> NHWC, zero-pad spatially (+ channel align), flatten frame rows.
    xh = jnp.transpose(x, (0, 2, 3, 1))
    xp = jnp.pad(xh, ((0, 0), (pad, pad), (pad, pad), (0, cin_pad - Cin)))
    Hp, Wp = H + 2 * pad, W + 2 * pad
    r_frame = N * Hp * Wp

    # Padded-frame shifts: input row for output frame row r and tap (i, j) is
    # r + i*Wp + j (taps never cross image boundaries for retained output pixels).
    shifts = tuple(i * Wp + j for i in range(k) for j in range(k))
    halo = shifts[-1]
    hb = _round_up(max(halo, 16), 16)        # halo block rows (bf16 sublane friendly)

    # Adaptive tile height: aim for >= 4 grid steps (keeps both v7x TCs busy),
    # cap by a per-step VMEM budget, and round to a multiple of the halo block.
    lane = 128
    per_row_bytes = (2 * _round_up(cin_pad, lane) * 2      # input block (dbl-buffered, bf16)
                     + _round_up(K_total, lane) * 2        # packing scratch (bf16)
                     + 2 * cout_pad * 2)                   # output block (dbl-buffered, bf16)
    vmem_budget = 24 * 1024 * 1024
    cap = max(hb, min(block_m_cap, vmem_budget // per_row_bytes))
    bm = min(cap, max(hb, -(-r_frame // 4)))
    block_m = _round_up(bm, hb)

    grid_m = -(-r_frame // block_m)
    r_out = grid_m * block_m
    x_flat = xp.reshape(r_frame, cin_pad)
    x_flat = jnp.pad(x_flat, ((0, r_out + hb - r_frame), (0, 0))).astype(jnp.bfloat16)

    out_frame = pl.pallas_call(
        partial(_conv_pack_kernel, shifts=shifts, cin_pad=cin_pad),
        out_shape=jax.ShapeDtypeStruct((r_out, cout_pad), jnp.bfloat16),
        grid=(grid_m,),
        in_specs=[
            pl.BlockSpec((block_m, cin_pad), lambda t: (t, 0)),              # current rows
            pl.BlockSpec((hb, cin_pad),
                         lambda t: ((t + 1) * (block_m // hb), 0)),          # halo rows
            pl.BlockSpec((K_total, cout_pad), lambda t: (0, 0)),             # 2-D weights (resident)
            pl.BlockSpec((1, cout_pad), lambda t: (0, 0)),                   # bias (resident)
        ],
        out_specs=pl.BlockSpec((block_m, cout_pad), lambda t: (t, 0)),
        scratch_shapes=[pltpu.VMEM((block_m, K_total), jnp.bfloat16)],       # packed MXU operand
        compiler_params=pltpu.CompilerParams(
            dimension_semantics=("parallel",),        # v7x: shard M tiles over both TCs
            vmem_limit_bytes=32 * 1024 * 1024,        # explicit, fits v5e/v6e/v7x
        ),
    )(x_flat, x_flat, w2d, bias2)

    # Crop the padded frame / padded channels back to the real output (NHWC).
    # TODO(synk): for stride > 1, iterate only valid output scanlines in the grid
    # instead of computing the dense stride-1 frame and discarding rows/cols here.
    frame = out_frame[:r_frame].reshape(N, Hp, Wp, cout_pad)
    y = frame[:, ::stride, ::stride, :][:, :Hout, :Wout, :Cout].astype(x.dtype)
    if not nchw_output:
        return y                                   # keep NHWC, skip the relayout below
    return jnp.transpose(y, (0, 3, 1, 2))          # NCHW to match the PyTorch module


if __name__ == "__main__":
    key = jax.random.PRNGKey(0)
    k_x, k_w, k_u = jax.random.split(key, 3)

    # Shapes consistent with ConvBlock(in_dim=4, out_dim=8, activation=ReLU)
    N, Cin, H, W = 2, 4, 16, 16
    Cout, ksize, stride = 8, 3, 1

    x = jax.random.normal(k_x, (N, Cin, H, W), dtype=jnp.float32)
    # conv_layer.weight.data.normal_(0, 1); conv_layer.bias.data.fill_(0.0)
    weight = jax.random.normal(k_w, (Cout, Cin, ksize, ksize), dtype=jnp.float32)
    bias = jnp.zeros((Cout,), dtype=jnp.float32)
    # register_buffer('u', torch.Tensor(1, out_channels).normal_())
    u = jax.random.normal(k_u, (1, Cout), dtype=jnp.float32)

    out = conv_block_forward(x, weight, bias, u, kernel_size=ksize, stride=stride)
    out = jax.block_until_ready(out)

    # Pure-JAX reference (spectral norm + conv + bias + ReLU) with inputs
    # quantized to bf16 exactly like the kernel's MXU operands.
    w_bar_ref, _ = spectral_normalize_weight(weight, u)
    w_q = w_bar_ref.astype(jnp.bfloat16).astype(jnp.float32)
    x_q = x.astype(jnp.bfloat16).astype(jnp.float32)
    pad = int(math.ceil((ksize - 1) / 2))
    ref = lax.conv_general_dilated(
        x_q, w_q, window_strides=(stride, stride),
        padding=[(pad, pad), (pad, pad)],
        dimension_numbers=("NCHW", "OIHW", "NCHW"),
        precision=lax.Precision.HIGHEST)
    ref = jnp.maximum(ref + bias[None, :, None, None], 0.0)

    assert out.shape == (N, Cout, H, W), out.shape
    assert jnp.allclose(out, ref, atol=5e-3, rtol=5e-3), \
        float(jnp.max(jnp.abs(out - ref)))
    print("KERNEL_OK")
</pallas_src>

<mosaic_0001>
module attributes {stable_mosaic.version = 11 : i64} {
  func.func @_conv_pack_kernel(%arg0: i32, %arg1: memref<192x8xbf16, #tpu.memory_space<vmem>>, %arg2: memref<48x8xbf16, #tpu.memory_space<vmem>>, %arg3: memref<72x128xbf16, #tpu.memory_space<vmem>>, %arg4: memref<1x128xf32, #tpu.memory_space<vmem>>, %arg5: memref<192x128xbf16, #tpu.memory_space<vmem>>, %arg6: memref<192x72xbf16, #tpu.memory_space<vmem>>) attributes {dimension_semantics = [#tpu.dimension_semantics<parallel>], iteration_bounds = array<i64: 4>, scalar_prefetch = 0 : i64, scratch_operands = 1 : i64, tpu.core_type = #tpu.core_type<tc>, window_params = [{transform_indices = @transform_0, window_bounds = array<i64: 192, 8>}, {transform_indices = @transform_1, window_bounds = array<i64: 48, 8>}, {pipeline_mode = #tpu.pipeline_mode<synchronous>, transform_indices = @transform_2, window_bounds = array<i64: 72, 128>}, {pipeline_mode = #tpu.pipeline_mode<synchronous>, transform_indices = @transform_3, window_bounds = array<i64: 1, 128>}, {transform_indices = @transform_4, window_bounds = array<i64: 192, 128>}]} {
    %c0 = arith.constant 0 : index
    %c0_0 = arith.constant 0 : index
    %0 = vector.load %arg1[%c0, %c0_0] : memref<192x8xbf16, #tpu.memory_space<vmem>>, vector<192x8xbf16>
    %c0_1 = arith.constant 0 : index
    %c0_2 = arith.constant 0 : index
    %1 = vector.load %arg2[%c0_1, %c0_2] : memref<48x8xbf16, #tpu.memory_space<vmem>>, vector<48x8xbf16>
    %2 = tpu.concatenate %0, %1 in 0 : vector<192x8xbf16>, vector<48x8xbf16> -> vector<240x8xbf16>
    %3 = vector.extract_strided_slice %2 {offsets = [0, 0], sizes = [192, 8], strides = [1, 1]} : vector<240x8xbf16> to vector<192x8xbf16>
    %c0_3 = arith.constant 0 : index
    %c0_4 = arith.constant 0 : index
    %4 = vector.load %arg6[%c0_3, %c0_4] : memref<192x72xbf16, #tpu.memory_space<vmem>>, vector<192x8xbf16>
    tpu.vector_store %arg6[%c0_3, %c0_4], %3 {strides = array<i32>} : memref<192x72xbf16, #tpu.memory_space<vmem>>, vector<192x8xbf16>,
    %5 = vector.extract_strided_slice %2 {offsets = [1, 0], sizes = [192, 8], strides = [1, 1]} : vector<240x8xbf16> to vector<192x8xbf16>
    %c0_5 = arith.constant 0 : index
    %c8 = arith.constant 8 : index
    %6 = vector.load %arg6[%c0_5, %c8] : memref<192x72xbf16, #tpu.memory_space<vmem>>, vector<192x8xbf16>
    tpu.vector_store %arg6[%c0_5, %c8], %5 {strides = array<i32>} : memref<192x72xbf16, #tpu.memory_space<vmem>>, vector<192x8xbf16>,
    %7 = vector.extract_strided_slice %2 {offsets = [2, 0], sizes = [192, 8], strides = [1, 1]} : vector<240x8xbf16> to vector<192x8xbf16>
    %c0_6 = arith.constant 0 : index
    %c16 = arith.constant 16 : index
    %8 = vector.load %arg6[%c0_6, %c16] : memref<192x72xbf16, #tpu.memory_space<vmem>>, vector<192x8xbf16>
    tpu.vector_store %arg6[%c0_6, %c16], %7 {strides = array<i32>} : memref<192x72xbf16, #tpu.memory_space<vmem>>, vector<192x8xbf16>,
    %9 = vector.extract_strided_slice %2 {offsets = [18, 0], sizes = [192, 8], strides = [1, 1]} : vector<240x8xbf16> to vector<192x8xbf16>
    %c0_7 = arith.constant 0 : index
    %c24 = arith.constant 24 : index
    %10 = vector.load %arg6[%c0_7, %c24] : memref<192x72xbf16, #tpu.memory_space<vmem>>, vector<192x8xbf16>
    tpu.vector_store %arg6[%c0_7, %c24], %9 {strides = array<i32>} : memref<192x72xbf16, #tpu.memory_space<vmem>>, vector<192x8xbf16>,
    %11 = vector.extract_strided_slice %2 {offsets = [19, 0], sizes = [192, 8], strides = [1, 1]} : vector<240x8xbf16> to vector<192x8xbf16>
    %c0_8 = arith.constant 0 : index
    %c32 = arith.constant 32 : index
    %12 = vector.load %arg6[%c0_8, %c32] : memref<192x72xbf16, #tpu.memory_space<vmem>>, vector<192x8xbf16>
    tpu.vector_store %arg6[%c0_8, %c32], %11 {strides = array<i32>} : memref<192x72xbf16, #tpu.memory_space<vmem>>, vector<192x8xbf16>,
    %13 = vector.extract_strided_slice %2 {offsets = [20, 0], sizes = [192, 8], strides = [1, 1]} : vector<240x8xbf16> to vector<192x8xbf16>
    %c0_9 = arith.constant 0 : index
    %c40 = arith.constant 40 : index
    %14 = vector.load %arg6[%c0_9, %c40] : memref<192x72xbf16, #tpu.memory_space<vmem>>, vector<192x8xbf16>
    tpu.vector_store %arg6[%c0_9, %c40], %13 {strides = array<i32>} : memref<192x72xbf16, #tpu.memory_space<vmem>>, vector<192x8xbf16>,
    %15 = vector.extract_strided_slice %2 {offsets = [36, 0], sizes = [192, 8], strides = [1, 1]} : vector<240x8xbf16> to vector<192x8xbf16>
    %c0_10 = arith.constant 0 : index
    %c48 = arith.constant 48 : index
    %16 = vector.load %arg6[%c0_10, %c48] : memref<192x72xbf16, #tpu.memory_space<vmem>>, vector<192x8xbf16>
    tpu.vector_store %arg6[%c0_10, %c48], %15 {strides = array<i32>} : memref<192x72xbf16, #tpu.memory_space<vmem>>, vector<192x8xbf16>,
    %17 = vector.extract_strided_slice %2 {offsets = [37, 0], sizes = [192, 8], strides = [1, 1]} : vector<240x8xbf16> to vector<192x8xbf16>
    %c0_11 = arith.constant 0 : index
    %c56 = arith.constant 56 : index
    %18 = vector.load %arg6[%c0_11, %c56] : memref<192x72xbf16, #tpu.memory_space<vmem>>, vector<192x8xbf16>
    tpu.vector_store %arg6[%c0_11, %c56], %17 {strides = array<i32>} : memref<192x72xbf16, #tpu.memory_space<vmem>>, vector<192x8xbf16>,
    %19 = vector.extract_strided_slice %2 {offsets = [38, 0], sizes = [192, 8], strides = [1, 1]} : vector<240x8xbf16> to vector<192x8xbf16>
    %c0_12 = arith.constant 0 : index
    %c64 = arith.constant 64 : index
    %20 = vector.load %arg6[%c0_12, %c64] : memref<192x72xbf16, #tpu.memory_space<vmem>>, vector<192x8xbf16>
    tpu.vector_store %arg6[%c0_12, %c64], %19 {strides = array<i32>} : memref<192x72xbf16, #tpu.memory_space<vmem>>, vector<192x8xbf16>,
    %c0_13 = arith.constant 0 : index
    %c0_14 = arith.constant 0 : index
    %21 = vector.load %arg6[%c0_13, %c0_14] : memref<192x72xbf16, #tpu.memory_space<vmem>>, vector<192x72xbf16>
    %c0_15 = arith.constant 0 : index
    %c0_16 = arith.constant 0 : index
    %22 = vector.load %arg3[%c0_15, %c0_16] : memref<72x128xbf16, #tpu.memory_space<vmem>>, vector<72x128xbf16>
    %cst = arith.constant dense<0.000000e+00> : vector<192x128xf32>
    %23 = tpu.matmul %21, %22, %cst {dimension_numbers = #tpu.dot_dimension_numbers<[1], [0], [0], [1], [0, 0, 1, 1], [], []>} : vector<192x72xbf16>, vector<72x128xbf16>, vector<192x128xf32> -> vector<192x128xf32>
    %c0_17 = arith.constant 0 : index
    %c0_18 = arith.constant 0 : index
    %24 = vector.load %arg4[%c0_17, %c0_18] : memref<1x128xf32, #tpu.memory_space<vmem>>, vector<1x128xf32>
    %25 = vector.broadcast %24 : vector<1x128xf32> to vector<192x128xf32>
    %26 = arith.addf %23, %25 : vector<192x128xf32>
    %cst_19 = arith.constant 0.000000e+00 : f32
    %27 = vector.broadcast %cst_19 : f32 to vector<192x128xf32>
    %28 = arith.maximumf %26, %27 : vector<192x128xf32>
    %29 = arith.truncf %28 : vector<192x128xf32> to vector<192x128xbf16>
    %c0_20 = arith.constant 0 : index
    %c0_21 = arith.constant 0 : index
    %30 = vector.load %arg5[%c0_20, %c0_21] : memref<192x128xbf16, #tpu.memory_space<vmem>>, vector<192x128xbf16>
    tpu.vector_store %arg5[%c0_20, %c0_21], %29 {strides = array<i32>} : memref<192x128xbf16, #tpu.memory_space<vmem>>, vector<192x128xbf16>,
    return
  }
  func.func @transform_0(%arg0: i32) -> (i32, i32) {
    %c0_i32 = arith.constant 0 : i32
    %c0_i32_0 = arith.constant 0 : i32
    return %arg0, %c0_i32 : i32, i32
  }
  func.func @transform_1(%arg0: i32) -> (i32, i32) {
    %c1_i32 = arith.constant 1 : i32
    %0 = arith.addi %arg0, %c1_i32 : i32
    %c4_i32 = arith.constant 4 : i32
    %1 = arith.muli %0, %c4_i32 : i32
    %c0_i32 = arith.constant 0 : i32
    %c0_i32_0 = arith.constant 0 : i32
    return %1, %c0_i32 : i32, i32
  }
  func.func @transform_2(%arg0: i32) -> (i32, i32) {
    %c0_i32 = arith.constant 0 : i32
    %c0_i32_0 = arith.constant 0 : i32
    %c0_i32_1 = arith.constant 0 : i32
    return %c0_i32, %c0_i32_0 : i32, i32
  }
  func.func @transform_3(%arg0: i32) -> (i32, i32) {
    %c0_i32 = arith.constant 0 : i32
    %c0_i32_0 = arith.constant 0 : i32
    %c0_i32_1 = arith.constant 0 : i32
    return %c0_i32, %c0_i32_0 : i32, i32
  }
  func.func @transform_4(%arg0: i32) -> (i32, i32) {
    %c0_i32 = arith.constant 0 : i32
    %c0_i32_0 = arith.constant 0 : i32
    return %arg0, %c0_i32 : i32, i32
  }
}

</mosaic_0001>

<llo_original>
// kernel: tpu_custom_call.1
$region0: #{tpu_custom_call.1}
  #allocation0 [shape = 'u32[]', space=smem, size = 0x4, offset = 0x4, fixed_abs, tag = 'smem constant byte address 0x4 - core index']
  #allocation1 [shape = 'u32[144,128]{1,0:T(1,128)}', space=vmem, size = 0x12000, scoped, tag = 'internal scratch']
  #allocation2 [shape = 'bf16[192,72]{1,0:T(8,128)(2,1)}', space=vmem, size = 0xc000, scoped, tag = 'scratch operand']
  %s0 = inlined_call_operand.vmem [shape: bf16[816,8], index: 0, kind: input, shape index: {}]
  %s1 = inlined_call_operand.vmem [shape: bf16[816,8], index: 1, kind: input, shape index: {}]
  %s2 = inlined_call_operand.vmem [shape: bf16[72,128], index: 2, kind: input, shape index: {}]
  %s3 = inlined_call_operand.vmem [shape: f32[1,128], index: 3, kind: input, shape index: {}]
  %s4 = inlined_call_operand.hbm [shape: bf16[768,128], index: 4, kind: output, shape index: {}]
  %s5 = sld [smem:[#allocation0]]
  $region49: #{tpu_custom_call.1} parent=0
    _
  %s7 = ssub.s32 1, %s5
  %s8 = scalar_select 0, %s7, %s5
  $region1: #{tpu_custom_call.1} parent=0
    #allocation3 [shape = 'u8[98304]{0}', space=vmem, size = 0x18000, scoped, tag = 'output window, operand 0']
    #allocation4 [shape = 's32[2]{0}', space=sflag, size = 0x8, scoped, tag = 'scoped memory for tpu_custom_call.1']
    %9 = vsyncpa [#allocation4], 0
    %s10 = scalar_lea.sflag [#allocation4], 1
    %11 = vsyncpa %s10, 0
    loop: start=0, step=1, limit=6
    $region2: #{tpu_custom_call.1} parent=1 // loop_pre_header
      _
    $region3: #{tpu_custom_call.1} parent=1 // loop_header
      %s13 = sphi 0, %s17
      %p14 = scmp.ge.s32.totalorder %s13, 6
      %s23 = sphi 0, %s25
      %s26 = sphi 0, %s23
      %s27 = sphi 0, %s26
      %s43 = sphi 0, %s27
      %s53 = sphi 0, %s55
      %s56 = sphi 0, %s53
      %s57 = sphi 0, %s56
      %s73 = sphi 0, %s57
      %s77 = sphi 0, %s77
      %s79 = sphi 0, %s77
      %s80 = sphi 0, %s79
      %s94 = sphi 0, %s80
      %s98 = sphi 0, %s98
      %s100 = sphi 0, %s98
      %s101 = sphi 0, %s100
      %s115 = sphi 0, %s101
      %s121 = sphi 0, %s123
      %s124 = sphi 0, %s121
      %s125 = sphi 0, %s124
      %s141 = sphi 0, %s125
    $region4: #{tpu_custom_call.1} parent=1 // loop_header_branch
      %16 = sbr.rel (%p14) target = $region8
    $region5: #{tpu_custom_call.1} parent=1 // loop_body
      %s18 = ssub.s32 %s13, 1
      %s19 = ssub.s32 %s13, 2
      %s20 = sadd.s32 %s13, 1
      %s21 = ssub.s32 %s13, %s20
      %p22 = scmp.eq.s32.totalorder %s21, 0
      %s24 = sadd.s32 %s23, 1
      %s25 = scalar_select %p22, %s23, %s24
      %p28 = pneg %p22
      %p29 = scmp.eq.s32.totalorder %s13, 3
      %p30 = por %p28, %p29
      %p31 = scmp.ne.s32.totalorder %s23, %s26
      %p32 = scmp.eq.s32.totalorder %s13, 0
      %p33 = por %p31, %p32
      %p34 = scmp.ne.s32.totalorder %s23, %s26
      %p35 = scmp.eq.s32.totalorder %s18, 3
      %p36 = por %p34, %p35
      %p37 = scmp.ne.s32.totalorder %s26, %s27
      %p38 = scmp.eq.s32.totalorder %s18, 0
      %p39 = por %p37, %p38
      %p40 = scmp.ne.s32.totalorder %s26, %s27
      %p41 = scmp.eq.s32.totalorder %s19, 3
      %p42 = por %p40, %p41
      %p44 = scmp.ne.s32.totalorder %s27, %s43
      %p45 = scmp.eq.s32.totalorder %s19, 0
      %p46 = por %p44, %p45
      %s47 = sadd.s32 %s13, 1
      %s48 = smul.u32 %s47, 4
      %s49 = sadd.s32 %s20, 1
      %s50 = smul.u32 %s49, 4
      %s51 = ssub.s32 %s48, %s50
      %p52 = scmp.eq.s32.totalorder %s51, 0
      %s54 = sadd.s32 %s53, 1
      %s55 = scalar_select %p52, %s53, %s54
      %p58 = pneg %p52
      %p59 = scmp.eq.s32.totalorder %s13, 3
      %p60 = por %p58, %p59
      %p61 = scmp.ne.s32.totalorder %s53, %s56
      %p62 = scmp.eq.s32.totalorder %s13, 0
      %p63 = por %p61, %p62
      %p64 = scmp.ne.s32.totalorder %s53, %s56
      %p65 = scmp.eq.s32.totalorder %s18, 3
      %p66 = por %p64, %p65
      %p67 = scmp.ne.s32.totalorder %s56, %s57
      %p68 = scmp.eq.s32.totalorder %s18, 0
      %p69 = por %p67, %p68
      %p70 = scmp.ne.s32.totalorder %s56, %s57
      %p71 = scmp.eq.s32.totalorder %s19, 3
      %p72 = por %p70, %p71
      %p74 = scmp.ne.s32.totalorder %s57, %s73
      %p75 = scmp.eq.s32.totalorder %s19, 0
      %p76 = por %p74, %p75
      %s78 = sadd.s32 %s77, 1
      %p81 = scmp.eq.s32.totalorder %s13, 3
      %p82 = scmp.ne.s32.totalorder %s77, %s79
      %p83 = scmp.eq.s32.totalorder %s13, 0
      %p84 = por %p82, %p83
      %p85 = scmp.ne.s32.totalorder %s77, %s79
      %p86 = scmp.eq.s32.totalorder %s18, 3
      %p87 = por %p85, %p86
      %p88 = scmp.ne.s32.totalorder %s79, %s80
      %p89 = scmp.eq.s32.totalorder %s18, 0
      %p90 = por %p88, %p89
      %p91 = scmp.ne.s32.totalorder %s79, %s80
      %p92 = scmp.eq.s32.totalorder %s19, 3
      %p93 = por %p91, %p92
      %p95 = scmp.ne.s32.totalorder %s80, %s94
      %p96 = scmp.eq.s32.totalorder %s19, 0
      %p97 = por %p95, %p96
      %s99 = sadd.s32 %s98, 1
      %p102 = scmp.eq.s32.totalorder %s13, 3
      %p103 = scmp.ne.s32.totalorder %s98, %s100
      %p104 = scmp.eq.s32.totalorder %s13, 0
      %p105 = por %p103, %p104
      %p106 = scmp.ne.s32.totalorder %s98, %s100
      %p107 = scmp.eq.s32.totalorder %s18, 3
      %p108 = por %p106, %p107
      %p109 = scmp.ne.s32.totalorder %s100, %s101
      %p110 = scmp.eq.s32.totalorder %s18, 0
      %p111 = por %p109, %p110
      %p112 = scmp.ne.s32.totalorder %s100, %s101
      %p113 = scmp.eq.s32.totalorder %s19, 3
      %p114 = por %p112, %p113
      %p116 = scmp.ne.s32.totalorder %s101, %s115
      %p117 = scmp.eq.s32.totalorder %s19, 0
      %p118 = por %p116, %p117
      %s119 = ssub.s32 %s13, %s20
      %p120 = scmp.eq.s32.totalorder %s119, 0
      %s122 = sadd.s32 %s121, 1
      %s123 = scalar_select %p120, %s121, %s122
      %p126 = pneg %p120
      %p127 = scmp.eq.s32.totalorder %s13, 3
      %p128 = por %p126, %p127
      %p129 = scmp.ne.s32.totalorder %s121, %s124
      %p130 = scmp.eq.s32.totalorder %s13, 0
      %p131 = por %p129, %p130
      %p132 = scmp.ne.s32.totalorder %s121, %s124
      %p133 = scmp.eq.s32.totalorder %s18, 3
      %p134 = por %p132, %p133
      %p135 = scmp.ne.s32.totalorder %s124, %s125
      %p136 = scmp.eq.s32.totalorder %s18, 0
      %p137 = por %p135, %p136
      %p138 = scmp.ne.s32.totalorder %s124, %s125
      %p139 = scmp.eq.s32.totalorder %s19, 3
      %p140 = por %p138, %p139
      %p142 = scmp.ne.s32.totalorder %s125, %s141
      %p143 = scmp.eq.s32.totalorder %s19, 0
      %p144 = por %p142, %p143
      %p145 = scmp.le.s32.totalorder 1, %s13
      %p146 = scmp.lt.s32.totalorder %s13, 5
      %p147 = pnand %p145, %p146
      %p148 = pneg %p147
      // Predicated region
      $region9: #{tpu_custom_call.1} parent=5 // pred_check
        _
      $region10: #{tpu_custom_call.1} parent=5 // pred_check_branch
        %150 = sbr.rel (%p147) target = $region12
      $region11: #{tpu_custom_call.1} parent=5 // pred_region
        %s151 = ssub.s32 %s13, 1
        // Predicated region
        $region13: #{tpu_custom_call.1} parent=11 // pred_check
          %p152 = pneg %p90
        $region14: #{tpu_custom_call.1} parent=11 // pred_check_branch
          %154 = sbr.rel (%p152) target = $region16
        $region15: #{tpu_custom_call.1} parent=11 // pred_region
          _
        $region16: #{tpu_custom_call.1} parent=11 // pred_fallthru
          _
        // Predicated region
        $region17: #{tpu_custom_call.1} parent=11 // pred_check
          %p155 = pneg %p111
        $region18: #{tpu_custom_call.1} parent=11 // pred_check_branch
          %157 = sbr.rel (%p155) target = $region20
        $region19: #{tpu_custom_call.1} parent=11 // pred_region
          _
        $region20: #{tpu_custom_call.1} parent=11 // pred_fallthru
          _
      $region12: #{tpu_custom_call.1} parent=5 // pred_fallthru
        _
      %p158 = scmp.lt.s32.totalorder %s13, 4
      // Predicated region
      $region21: #{tpu_custom_call.1} parent=5 // pred_check
        %p159 = pneg %p158
      $region22: #{tpu_custom_call.1} parent=5 // pred_check_branch
        %161 = sbr.rel (%p159) target = $region24
      $region23: #{tpu_custom_call.1} parent=5 // pred_region
        // Predicated region
        $region25: #{tpu_custom_call.1} parent=23 // pred_check
          %p162 = pneg %p33
        $region26: #{tpu_custom_call.1} parent=23 // pred_check_branch
          %164 = sbr.rel (%p162) target = $region28
        $region27: #{tpu_custom_call.1} parent=23 // pred_region
          %s165 = smul.u32 24, %s13
          %s166 = ssub.s32 102, %s165
          %p167 = scmp.lt.s32.totalorder %s166, 24
          %s168 = scalar_select %p167, %s166, 24
          %s169 = smul.u32 64, %s168
          %p170 = scmp.lt.s32.totalorder %s165, 101
          %s171 = scalar_select %p170, %s165, 101
          %s172 = smul.addr %s171, 4
          %s173 = scalar_lea.vmem %s0, %s172
          %s174 = smul.u32 24, %s13
          %s175 = ssub.s32 102, %s174
          %p176 = scmp.lt.s32.totalorder %s175, 24
          %s177 = scalar_select %p176, %s175, 24
          %s178 = smul.u32 64, %s177
        $region28: #{tpu_custom_call.1} parent=23 // pred_fallthru
          _
        // Predicated region
        $region29: #{tpu_custom_call.1} parent=23 // pred_check
          %p179 = pneg %p63
        $region30: #{tpu_custom_call.1} parent=23 // pred_check_branch
          %181 = sbr.rel (%p179) target = $region32
        $region31: #{tpu_custom_call.1} parent=23 // pred_region
          %s182 = sadd.s32 %s13, 1
          %s183 = smul.u32 %s182, 4
          %s184 = smul.u32 6, %s183
          %p185 = scmp.lt.s32.totalorder %s184, 101
          %s186 = scalar_select %p185, %s184, 101
          %s187 = smul.addr %s186, 4
          %s188 = scalar_lea.vmem %s1, %s187
          %s189 = sadd.s32 %s13, 1
          %s190 = smul.u32 %s189, 4
          %s191 = smul.u32 6, %s190
        $region32: #{tpu_custom_call.1} parent=23 // pred_fallthru
          _
      $region24: #{tpu_custom_call.1} parent=5 // pred_fallthru
        _
      %p192 = scmp.le.s32.totalorder 1, %s13
      %p193 = scmp.lt.s32.totalorder %s13, 5
      %p194 = pnand %p192, %p193
      %p195 = pneg %p194
      // Predicated region
      $region33: #{tpu_custom_call.1} parent=5 // pred_check
        _
      $region34: #{tpu_custom_call.1} parent=5 // pred_check_branch
        %197 = sbr.rel (%p194) target = $region36
      $region35: #{tpu_custom_call.1} parent=5 // pred_region
        %s198 = ssub.s32 %s13, 1
        %s199 = smul.u32 24, %s18
        %s200 = ssub.s32 102, %s199
        %p201 = scmp.lt.s32.totalorder %s200, 24
        %s202 = scalar_select %p201, %s200, 24
        %s203 = smul.u32 64, %s202
        %p204 = scmp.lt.s32.totalorder %s199, 101
        %s205 = scalar_select %p204, %s199, 101
        %s206 = smul.addr %s205, 4
        %s207 = scalar_lea.vmem %s0, %s206
        %p208 = pneg %p39
        %p209 = pneg %p36
        %s210 = sadd.s32 %s18, 1
        %s211 = smul.u32 %s210, 4
        %s212 = smul.u32 6, %s211
        %p213 = scmp.lt.s32.totalorder %s212, 101
        %s214 = scalar_select %p213, %s212, 101
        %s215 = smul.addr %s214, 4
        %s216 = scalar_lea.vmem %s1, %s215
        %p217 = pneg %p69
        %p218 = pneg %p66
        %p219 = pneg %p90
        %p220 = pneg %p87
        %p221 = pneg %p111
        %p222 = pneg %p108
        %p223 = pneg %p137
        %p224 = pneg %p134
        %s225 = sand.u32 %s124, 1
        %s226 = scalar_lea.sflag [#allocation4], %s225
        %s227 = sand.u32 %s124, 1
        %s228 = smul.addr %s227, 96
        %s229 = scalar_lea.vmem [#allocation3], %s228
        %s230 = smul.u32 24, %s18
        %s231 = ssub.s32 102, %s230
        %p232 = scmp.lt.s32.totalorder %s231, 24
        %s233 = scalar_select %p232, %s231, 24
        %s234 = smul.u32 64, %s233
        %p235 = scmp.lt.s32.totalorder %s230, 101
        %s236 = scalar_select %p235, %s230, 101
        %s237 = smul.addr %s236, 4
        %s238 = scalar_lea.vmem %s0, %s237
        %s239 = smul.u32 24, %s18
        %s240 = ssub.s32 102, %s239
        %p241 = scmp.lt.s32.totalorder %s240, 24
        %s242 = scalar_select %p241, %s240, 24
        %s243 = smul.u32 64, %s242
        %s244 = sadd.s32 %s18, 1
        %s245 = smul.u32 %s244, 4
        %s246 = smul.u32 6, %s245
        %p247 = scmp.lt.s32.totalorder %s246, 101
        %s248 = scalar_select %p247, %s246, 101
        %s249 = smul.addr %s248, 4
        %s250 = scalar_lea.vmem %s1, %s249
        %s251 = sadd.s32 %s18, 1
        %s252 = smul.u32 %s251, 4
        %s253 = smul.u32 6, %s252
        %s254 = smul.u32 24, %s18
        %v256 = vld [vmem:[%s238] sm:$0xf]
        %v257 = vld [vmem:[%s238 + $0x4] sm:$0xf]
        %v258 = vld [vmem:[%s238 + $0x8] sm:$0xf]
        %v259 = vld [vmem:[%s238 + $0xc] sm:$0xf]
        %v260 = vld [vmem:[%s238 + $0x10] sm:$0xf]
        %v261 = vld [vmem:[%s238 + $0x14] sm:$0xf]
        %v262 = vld [vmem:[%s238 + $0x18] sm:$0xf]
        %v263 = vld [vmem:[%s238 + $0x1c] sm:$0xf]
        %v264 = vld [vmem:[%s238 + $0x20] sm:$0xf]
        %v265 = vld [vmem:[%s238 + $0x24] sm:$0xf]
        %v266 = vld [vmem:[%s238 + $0x28] sm:$0xf]
        %v267 = vld [vmem:[%s238 + $0x2c] sm:$0xf]
        %v268 = vld [vmem:[%s238 + $0x30] sm:$0xf]
        %v269 = vld [vmem:[%s238 + $0x34] sm:$0xf]
        %v270 = vld [vmem:[%s238 + $0x38] sm:$0xf]
        %v271 = vld [vmem:[%s238 + $0x3c] sm:$0xf]
        %v272 = vld [vmem:[%s238 + $0x40] sm:$0xf]
        %v273 = vld [vmem:[%s238 + $0x44] sm:$0xf]
        %v274 = vld [vmem:[%s238 + $0x48] sm:$0xf]
        %v275 = vld [vmem:[%s238 + $0x4c] sm:$0xf]
        %v276 = vld [vmem:[%s238 + $0x50] sm:$0xf]
        %v277 = vld [vmem:[%s238 + $0x54] sm:$0xf]
        %v278 = vld [vmem:[%s238 + $0x58] sm:$0xf]
        %v279 = vld [vmem:[%s238 + $0x5c] sm:$0xf]
        %v280 = vld [vmem:[%s250] sm:$0xf]
        %v281 = vld [vmem:[%s250 + $0x4] sm:$0xf]
        %v282 = vld [vmem:[%s250 + $0x8] sm:$0xf]
        %v283 = vld [vmem:[%s250 + $0xc] sm:$0xf]
        %v284 = vld [vmem:[%s250 + $0x10] sm:$0xf]
        %v309 = vunpack.c.l.b16 %v256
        %v310 = vunpack.c.l.b16 %v257
        %v311 = vunpack.c.l.b16 %v258
        %v312 = vunpack.c.l.b16 %v259
        %v313 = vunpack.c.l.b16 %v260
        %v314 = vunpack.c.l.b16 %v261
        %v315 = vunpack.c.l.b16 %v262
        %v316 = vunpack.c.l.b16 %v263
        %v317 = vunpack.c.l.b16 %v264
        %v318 = vunpack.c.l.b16 %v265
        %v319 = vunpack.c.l.b16 %v266
        %v320 = vunpack.c.l.b16 %v267
        %v321 = vunpack.c.l.b16 %v268
        %v322 = vunpack.c.l.b16 %v269
        %v323 = vunpack.c.l.b16 %v270
        %v324 = vunpack.c.l.b16 %v271
        %v325 = vunpack.c.l.b16 %v272
        %v326 = vunpack.c.l.b16 %v273
        %v327 = vunpack.c.l.b16 %v274
        %v328 = vunpack.c.l.b16 %v275
        %v329 = vunpack.c.l.b16 %v276
        %v330 = vunpack.c.l.b16 %v277
        %v331 = vunpack.c.l.b16 %v278
        %v332 = vunpack.c.l.b16 %v279
        %v338 = vunpack.c.l.b16 %v280
        %v339 = vunpack.c.l.b16 %v281
        %v340 = vunpack.c.l.b16 %v282
        %v341 = vunpack.c.l.b16 %v283
        %v342 = vunpack.c.l.b16 %v284
        %v343 = vpack.c.b16 %v309, %v309
        %v344 = vpack.c.b16 %v310, %v310
        %v345 = vpack.c.b16 %v311, %v311
        %v346 = vpack.c.b16 %v312, %v312
        %v347 = vpack.c.b16 %v313, %v313
        %v348 = vpack.c.b16 %v314, %v314
        %v349 = vpack.c.b16 %v315, %v315
        %v350 = vpack.c.b16 %v316, %v316
        %v351 = vpack.c.b16 %v317, %v317
        %v352 = vpack.c.b16 %v318, %v318
        %v353 = vpack.c.b16 %v319, %v319
        %v354 = vpack.c.b16 %v320, %v320
        %v355 = vpack.c.b16 %v321, %v321
        %v356 = vpack.c.b16 %v322, %v322
        %v357 = vpack.c.b16 %v323, %v323
        %v358 = vpack.c.b16 %v324, %v324
        %v359 = vpack.c.b16 %v325, %v325
        %v360 = vpack.c.b16 %v326, %v326
        %v361 = vpack.c.b16 %v327, %v327
        %v362 = vpack.c.b16 %v328, %v328
        %v363 = vpack.c.b16 %v329, %v329
        %v364 = vpack.c.b16 %v330, %v330
        %v365 = vpack.c.b16 %v331, %v331
        %v366 = vpack.c.b16 %v332, %v332
        %vm391 = vcmask 60416
        %392 = vst.msk [vmem:[#allocation2] sm:$0xf] %vm391, %v343
        %393 = vst.msk [vmem:[#allocation2 + $0x4] sm:$0xf] %vm391, %v344
        %394 = vst.msk [vmem:[#allocation2 + $0x8] sm:$0xf] %vm391, %v345
        %395 = vst.msk [vmem:[#allocation2 + $0xc] sm:$0xf] %vm391, %v346
        %396 = vst.msk [vmem:[#allocation2 + $0x10] sm:$0xf] %vm391, %v347
        %397 = vst.msk [vmem:[#allocation2 + $0x14] sm:$0xf] %vm391, %v348
        %398 = vst.msk [vmem:[#allocation2 + $0x18] sm:$0xf] %vm391, %v349
        %399 = vst.msk [vmem:[#allocation2 + $0x1c] sm:$0xf] %vm391, %v350
        %400 = vst.msk [vmem:[#allocation2 + $0x20] sm:$0xf] %vm391, %v351
        %401 = vst.msk [vmem:[#allocation2 + $0x24] sm:$0xf] %vm391, %v352
        %402 = vst.msk [vmem:[#allocation2 + $0x28] sm:$0xf] %vm391, %v353
        %403 = vst.msk [vmem:[#allocation2 + $0x2c] sm:$0xf] %vm391, %v354
        %404 = vst.msk [vmem:[#allocation2 + $0x30] sm:$0xf] %vm391, %v355
        %405 = vst.msk [vmem:[#allocation2 + $0x34] sm:$0xf] %vm391, %v356
        %406 = vst.msk [vmem:[#allocation2 + $0x38] sm:$0xf] %vm391, %v357
        %407 = vst.msk [vmem:[#allocation2 + $0x3c] sm:$0xf] %vm391, %v358
        %408 = vst.msk [vmem:[#allocation2 + $0x40] sm:$0xf] %vm391, %v359
        %409 = vst.msk [vmem:[#allocation2 + $0x44] sm:$0xf] %vm391, %v360
        %410 = vst.msk [vmem:[#allocation2 + $0x48] sm:$0xf] %vm391, %v361
        %411 = vst.msk [vmem:[#allocation2 + $0x4c] sm:$0xf] %vm391, %v362
        %412 = vst.msk [vmem:[#allocation2 + $0x50] sm:$0xf] %vm391, %v363
        %413 = vst.msk [vmem:[#allocation2 + $0x54] sm:$0xf] %vm391, %v364
        %414 = vst.msk [vmem:[#allocation2 + $0x58] sm:$0xf] %vm391, %v365
        %415 = vst.msk [vmem:[#allocation2 + $0x5c] sm:$0xf] %vm391, %v366
        %v416 = vpack.c.b16 %v338, %v338
        %vm417 = vsmask.f32 3328
        %vm418 = vsmask.f32 7440
        %vm419 = vmor %vm417, %vm418
        %v421 = vshrl.u32 %v343, 16
        %v423 = vrot.slane %v421, 4
        %v424 = vshll.u32 %v343, 16
        %v426 = vrot.slane %v424, 5
        %v427 = vor.u32 %v423, %v426
        %v428 = vrot.slane %v427, 4
        %v430 = vshll.u32 %v344, 16
        %v432 = vrot.slane %v430, 5
        %v433 = vsel %vm419, %v428, %v432
        %v434 = vshrl.u32 %v344, 16
        %v436 = vrot.slane %v434, 4
        %v437 = vor.u32 %v436, %v432
        %v438 = vrot.slane %v437, 4
        %v440 = vshll.u32 %v345, 16
        %v442 = vrot.slane %v440, 5
        %v443 = vsel %vm419, %v438, %v442
        %v444 = vshrl.u32 %v345, 16
        %v446 = vrot.slane %v444, 4
        %v447 = vor.u32 %v446, %v442
        %v448 = vrot.slane %v447, 4
        %v450 = vshll.u32 %v346, 16
        %v452 = vrot.slane %v450, 5
        %v453 = vsel %vm419, %v448, %v452
        %v454 = vshrl.u32 %v346, 16
        %v456 = vrot.slane %v454, 4
        %v457 = vor.u32 %v456, %v452
        %v458 = vrot.slane %v457, 4
        %v460 = vshll.u32 %v347, 16
        %v462 = vrot.slane %v460, 5
        %v463 = vsel %vm419, %v458, %v462
        %v464 = vshrl.u32 %v347, 16
        %v466 = vrot.slane %v464, 4
        %v467 = vor.u32 %v466, %v462
        %v468 = vrot.slane %v467, 4
        %v470 = vshll.u32 %v348, 16
        %v472 = vrot.slane %v470, 5
        %v473 = vsel %vm419, %v468, %v472
        %v474 = vshrl.u32 %v348, 16
        %v476 = vrot.slane %v474, 4
        %v477 = vor.u32 %v476, %v472
        %v478 = vrot.slane %v477, 4
        %v480 = vshll.u32 %v349, 16
        %v482 = vrot.slane %v480, 5
        %v483 = vsel %vm419, %v478, %v482
        %v484 = vshrl.u32 %v349, 16
        %v486 = vrot.slane %v484, 4
        %v487 = vor.u32 %v486, %v482
        %v488 = vrot.slane %v487, 4
        %v490 = vshll.u32 %v350, 16
        %v492 = vrot.slane %v490, 5
        %v493 = vsel %vm419, %v488, %v492
        %v494 = vshrl.u32 %v350, 16
        %v496 = vrot.slane %v494, 4
        %v497 = vor.u32 %v496, %v492
        %v498 = vrot.slane %v497, 4
        %v500 = vshll.u32 %v351, 16
        %v502 = vrot.slane %v500, 5
        %v503 = vsel %vm419, %v498, %v502
        %v504 = vshrl.u32 %v351, 16
        %v506 = vrot.slane %v504, 4
        %v507 = vor.u32 %v506, %v502
        %v508 = vrot.slane %v507, 4
        %v510 = vshll.u32 %v352, 16
        %v512 = vrot.slane %v510, 5
        %v513 = vsel %vm419, %v508, %v512
        %v514 = vshrl.u32 %v352, 16
        %v516 = vrot.slane %v514, 4
        %v517 = vor.u32 %v516, %v512
        %v518 = vrot.slane %v517, 4
        %v520 = vshll.u32 %v353, 16
        %v522 = vrot.slane %v520, 5
        %v523 = vsel %vm419, %v518, %v522
        %v524 = vshrl.u32 %v353, 16
        %v526 = vrot.slane %v524, 4
        %v527 = vor.u32 %v526, %v522
        %v528 = vrot.slane %v527, 4
        %v530 = vshll.u32 %v354, 16
        %v532 = vrot.slane %v530, 5
        %v533 = vsel %vm419, %v528, %v532
        %v534 = vshrl.u32 %v354, 16
        %v536 = vrot.slane %v534, 4
        %v537 = vor.u32 %v536, %v532
        %v538 = vrot.slane %v537, 4
        %v540 = vshll.u32 %v355, 16
        %v542 = vrot.slane %v540, 5
        %v543 = vsel %vm419, %v538, %v542
        %v544 = vshrl.u32 %v355, 16
        %v546 = vrot.slane %v544, 4
        %v547 = vor.u32 %v546, %v542
        %v548 = vrot.slane %v547, 4
        %v550 = vshll.u32 %v356, 16
        %v552 = vrot.slane %v550, 5
        %v553 = vsel %vm419, %v548, %v552
        %v554 = vshrl.u32 %v356, 16
        %v556 = vrot.slane %v554, 4
        %v557 = vor.u32 %v556, %v552
        %v558 = vrot.slane %v557, 4
        %v560 = vshll.u32 %v357, 16
        %v562 = vrot.slane %v560, 5
        %v563 = vsel %vm419, %v558, %v562
        %v564 = vshrl.u32 %v357, 16
        %v566 = vrot.slane %v564, 4
        %v567 = vor.u32 %v566, %v562
        %v568 = vrot.slane %v567, 4
        %v570 = vshll.u32 %v358, 16
        %v572 = vrot.slane %v570, 5
        %v573 = vsel %vm419, %v568, %v572
        %v574 = vshrl.u32 %v358, 16
        %v576 = vrot.slane %v574, 4
        %v577 = vor.u32 %v576, %v572
        %v578 = vrot.slane %v577, 4
        %v580 = vshll.u32 %v359, 16
        %v582 = vrot.slane %v580, 5
        %v583 = vsel %vm419, %v578, %v582
        %v584 = vshrl.u32 %v359, 16
        %v586 = vrot.slane %v584, 4
        %v587 = vor.u32 %v586, %v582
        %v588 = vrot.slane %v587, 4
        %v590 = vshll.u32 %v360, 16
        %v592 = vrot.slane %v590, 5
        %v593 = vsel %vm419, %v588, %v592
        %v594 = vshrl.u32 %v360, 16
        %v596 = vrot.slane %v594, 4
        %v597 = vor.u32 %v596, %v592
        %v598 = vrot.slane %v597, 4
        %v600 = vshll.u32 %v361, 16
        %v602 = vrot.slane %v600, 5
        %v603 = vsel %vm419, %v598, %v602
        %v604 = vshrl.u32 %v361, 16
        %v606 = vrot.slane %v604, 4
        %v607 = vor.u32 %v606, %v602
        %v608 = vrot.slane %v607, 4
        %v610 = vshll.u32 %v362, 16
        %v612 = vrot.slane %v610, 5
        %v613 = vsel %vm419, %v608, %v612
        %v614 = vshrl.u32 %v362, 16
        %v616 = vrot.slane %v614, 4
        %v617 = vor.u32 %v616, %v612
        %v618 = vrot.slane %v617, 4
        %v620 = vshll.u32 %v363, 16
        %v622 = vrot.slane %v620, 5
        %v623 = vsel %vm419, %v618, %v622
        %v624 = vshrl.u32 %v363, 16
        %v626 = vrot.slane %v624, 4
        %v627 = vor.u32 %v626, %v622
        %v628 = vrot.slane %v627, 4
        %v630 = vshll.u32 %v364, 16
        %v632 = vrot.slane %v630, 5
        %v633 = vsel %vm419, %v628, %v632
        %v634 = vshrl.u32 %v364, 16
        %v636 = vrot.slane %v634, 4
        %v637 = vor.u32 %v636, %v632
        %v638 = vrot.slane %v637, 4
        %v640 = vshll.u32 %v365, 16
        %v642 = vrot.slane %v640, 5
        %v643 = vsel %vm419, %v638, %v642
        %v644 = vshrl.u32 %v365, 16
        %v646 = vrot.slane %v644, 4
        %v647 = vor.u32 %v646, %v642
        %v648 = vrot.slane %v647, 4
        %v650 = vshll.u32 %v366, 16
        %v652 = vrot.slane %v650, 5
        %v653 = vsel %vm419, %v648, %v652
        %v654 = vshrl.u32 %v366, 16
        %v656 = vrot.slane %v654, 4
        %v657 = vor.u32 %v656, %v652
        %v658 = vrot.slane %v657, 4
        %v660 = vshll.u32 %v416, 16
        %v662 = vrot.slane %v660, 5
        %v663 = vsel %vm419, %v658, %v662
        %664 = vrot.lane.b32.xlu0 %v433, 8
        %v665 = vpop.permute.xlu0 %664
        %666 = vrot.lane.b32.xlu0 %v443, 8
        %v667 = vpop.permute.xlu0 %666
        %668 = vrot.lane.b32.xlu0 %v453, 8
        %v669 = vpop.permute.xlu0 %668
        %670 = vrot.lane.b32.xlu0 %v463, 8
        %v671 = vpop.permute.xlu0 %670
        %672 = vrot.lane.b32.xlu0 %v473, 8
        %v673 = vpop.permute.xlu0 %672
        %674 = vrot.lane.b32.xlu0 %v483, 8
        %v675 = vpop.permute.xlu0 %674
        %676 = vrot.lane.b32.xlu0 %v493, 8
        %v677 = vpop.permute.xlu0 %676
        %678 = vrot.lane.b32.xlu0 %v503, 8
        %v679 = vpop.permute.xlu0 %678
        %680 = vrot.lane.b32.xlu0 %v513, 8
        %v681 = vpop.permute.xlu0 %680
        %682 = vrot.lane.b32.xlu0 %v523, 8
        %v683 = vpop.permute.xlu0 %682
        %684 = vrot.lane.b32.xlu0 %v533, 8
        %v685 = vpop.permute.xlu0 %684
        %686 = vrot.lane.b32.xlu0 %v543, 8
        %v687 = vpop.permute.xlu0 %686
        %688 = vrot.lane.b32.xlu0 %v553, 8
        %v689 = vpop.permute.xlu0 %688
        %690 = vrot.lane.b32.xlu0 %v563, 8
        %v691 = vpop.permute.xlu0 %690
        %692 = vrot.lane.b32.xlu0 %v573, 8
        %v693 = vpop.permute.xlu0 %692
        %694 = vrot.lane.b32.xlu0 %v583, 8
        %v695 = vpop.permute.xlu0 %694
        %696 = vrot.lane.b32.xlu0 %v593, 8
        %v697 = vpop.permute.xlu0 %696
        %698 = vrot.lane.b32.xlu0 %v603, 8
        %v699 = vpop.permute.xlu0 %698
        %700 = vrot.lane.b32.xlu0 %v613, 8
        %v701 = vpop.permute.xlu0 %700
        %702 = vrot.lane.b32.xlu0 %v623, 8
        %v703 = vpop.permute.xlu0 %702
        %704 = vrot.lane.b32.xlu0 %v633, 8
        %v705 = vpop.permute.xlu0 %704
        %706 = vrot.lane.b32.xlu0 %v643, 8
        %v707 = vpop.permute.xlu0 %706
        %708 = vrot.lane.b32.xlu0 %v653, 8
        %v709 = vpop.permute.xlu0 %708
        %710 = vrot.lane.b32.xlu0 %v663, 8
        %v711 = vpop.permute.xlu0 %710
        %vm736 = vcmask 126016
        %737 = vst.msk [vmem:[#allocation2] sm:$0xf] %vm736, %v665
        %738 = vst.msk [vmem:[#allocation2 + $0x4] sm:$0xf] %vm736, %v667
        %739 = vst.msk [vmem:[#allocation2 + $0x8] sm:$0xf] %vm736, %v669
        %740 = vst.msk [vmem:[#allocation2 + $0xc] sm:$0xf] %vm736, %v671
        %741 = vst.msk [vmem:[#allocation2 + $0x10] sm:$0xf] %vm736, %v673
        %742 = vst.msk [vmem:[#allocation2 + $0x14] sm:$0xf] %vm736, %v675
        %743 = vst.msk [vmem:[#allocation2 + $0x18] sm:$0xf] %vm736, %v677
        %744 = vst.msk [vmem:[#allocation2 + $0x1c] sm:$0xf] %vm736, %v679
        %745 = vst.msk [vmem:[#allocation2 + $0x20] sm:$0xf] %vm736, %v681
        %746 = vst.msk [vmem:[#allocation2 + $0x24] sm:$0xf] %vm736, %v683
        %747 = vst.msk [vmem:[#allocation2 + $0x28] sm:$0xf] %vm736, %v685
        %748 = vst.msk [vmem:[#allocation2 + $0x2c] sm:$0xf] %vm736, %v687
        %749 = vst.msk [vmem:[#allocation2 + $0x30] sm:$0xf] %vm736, %v689
        %750 = vst.msk [vmem:[#allocation2 + $0x34] sm:$0xf] %vm736, %v691
        %751 = vst.msk [vmem:[#allocation2 + $0x38] sm:$0xf] %vm736, %v693
        %752 = vst.msk [vmem:[#allocation2 + $0x3c] sm:$0xf] %vm736, %v695
        %753 = vst.msk [vmem:[#allocation2 + $0x40] sm:$0xf] %vm736, %v697
        %754 = vst.msk [vmem:[#allocation2 + $0x44] sm:$0xf] %vm736, %v699
        %755 = vst.msk [vmem:[#allocation2 + $0x48] sm:$0xf] %vm736, %v701
        %756 = vst.msk [vmem:[#allocation2 + $0x4c] sm:$0xf] %vm736, %v703
        %757 = vst.msk [vmem:[#allocation2 + $0x50] sm:$0xf] %vm736, %v705
        %758 = vst.msk [vmem:[#allocation2 + $0x54] sm:$0xf] %vm736, %v707
        %759 = vst.msk [vmem:[#allocation2 + $0x58] sm:$0xf] %vm736, %v709
        %760 = vst.msk [vmem:[#allocation2 + $0x5c] sm:$0xf] %vm736, %v711
        %vm761 = vcmask 1042432
        %vm762 = vcmask 1046532
        %vm763 = vmor %vm761, %vm762
        %v764 = vrot.slane %v343, 5
        %v765 = vrot.slane %v764, 4
        %v766 = vrot.slane %v344, 5
        %v767 = vsel %vm763, %v765, %v766
        %v768 = vrot.slane %v766, 4
        %v769 = vrot.slane %v345, 5
        %v770 = vsel %vm763, %v768, %v769
        %v771 = vrot.slane %v769, 4
        %v772 = vrot.slane %v346, 5
        %v773 = vsel %vm763, %v771, %v772
        %v774 = vrot.slane %v772, 4
        %v775 = vrot.slane %v347, 5
        %v776 = vsel %vm763, %v774, %v775
        %v777 = vrot.slane %v775, 4
        %v778 = vrot.slane %v348, 5
        %v779 = vsel %vm763, %v777, %v778
        %v780 = vrot.slane %v778, 4
        %v781 = vrot.slane %v349, 5
        %v782 = vsel %vm763, %v780, %v781
        %v783 = vrot.slane %v781, 4
        %v784 = vrot.slane %v350, 5
        %v785 = vsel %vm763, %v783, %v784
        %v786 = vrot.slane %v784, 4
        %v787 = vrot.slane %v351, 5
        %v788 = vsel %vm763, %v786, %v787
        %v789 = vrot.slane %v787, 4
        %v790 = vrot.slane %v352, 5
        %v791 = vsel %vm763, %v789, %v790
        %v792 = vrot.slane %v790, 4
        %v793 = vrot.slane %v353, 5
        %v794 = vsel %vm763, %v792, %v793
        %v795 = vrot.slane %v793, 4
        %v796 = vrot.slane %v354, 5
        %v797 = vsel %vm763, %v795, %v796
        %v798 = vrot.slane %v796, 4
        %v799 = vrot.slane %v355, 5
        %v800 = vsel %vm763, %v798, %v799
        %v801 = vrot.slane %v799, 4
        %v802 = vrot.slane %v356, 5
        %v803 = vsel %vm763, %v801, %v802
        %v804 = vrot.slane %v802, 4
        %v805 = vrot.slane %v357, 5
        %v806 = vsel %vm763, %v804, %v805
        %v807 = vrot.slane %v805, 4
        %v808 = vrot.slane %v358, 5
        %v809 = vsel %vm763, %v807, %v808
        %v810 = vrot.slane %v808, 4
        %v811 = vrot.slane %v359, 5
        %v812 = vsel %vm763, %v810, %v811
        %v813 = vrot.slane %v811, 4
        %v814 = vrot.slane %v360, 5
        %v815 = vsel %vm763, %v813, %v814
        %v816 = vrot.slane %v814, 4
        %v817 = vrot.slane %v361, 5
        %v818 = vsel %vm763, %v816, %v817
        %v819 = vrot.slane %v817, 4
        %v820 = vrot.slane %v362, 5
        %v821 = vsel %vm763, %v819, %v820
        %v822 = vrot.slane %v820, 4
        %v823 = vrot.slane %v363, 5
        %v824 = vsel %vm763, %v822, %v823
        %v825 = vrot.slane %v823, 4
        %v826 = vrot.slane %v364, 5
        %v827 = vsel %vm763, %v825, %v826
        %v828 = vrot.slane %v826, 4
        %v829 = vrot.slane %v365, 5
        %v830 = vsel %vm763, %v828, %v829
        %v831 = vrot.slane %v829, 4
        %v832 = vrot.slane %v366, 5
        %v833 = vsel %vm763, %v831, %v832
        %v834 = vrot.slane %v832, 4
        %v835 = vrot.slane %v416, 5
        %v836 = vsel %vm763, %v834, %v835
        %837 = vrot.lane.b32.xlu0 %v767, 16
        %v838 = vpop.permute.xlu0 %837
        %839 = vrot.lane.b32.xlu0 %v770, 16
        %v840 = vpop.permute.xlu0 %839
        %841 = vrot.lane.b32.xlu0 %v773, 16
        %v842 = vpop.permute.xlu0 %841
        %843 = vrot.lane.b32.xlu0 %v776, 16
        %v844 = vpop.permute.xlu0 %843
        %845 = vrot.lane.b32.xlu0 %v779, 16
        %v846 = vpop.permute.xlu0 %845
        %847 = vrot.lane.b32.xlu0 %v782, 16
        %v848 = vpop.permute.xlu0 %847
        %849 = vrot.lane.b32.xlu0 %v785, 16
        %v850 = vpop.permute.xlu0 %849
        %851 = vrot.lane.b32.xlu0 %v788, 16
        %v852 = vpop.permute.xlu0 %851
        %853 = vrot.lane.b32.xlu0 %v791, 16
        %v854 = vpop.permute.xlu0 %853
        %855 = vrot.lane.b32.xlu0 %v794, 16
        %v856 = vpop.permute.xlu0 %855
        %857 = vrot.lane.b32.xlu0 %v797, 16
        %v858 = vpop.permute.xlu0 %857
        %859 = vrot.lane.b32.xlu0 %v800, 16
        %v860 = vpop.permute.xlu0 %859
        %861 = vrot.lane.b32.xlu0 %v803, 16
        %v862 = vpop.permute.xlu0 %861
        %863 = vrot.lane.b32.xlu0 %v806, 16
        %v864 = vpop.permute.xlu0 %863
        %865 = vrot.lane.b32.xlu0 %v809, 16
        %v866 = vpop.permute.xlu0 %865
        %867 = vrot.lane.b32.xlu0 %v812, 16
        %v868 = vpop.permute.xlu0 %867
        %869 = vrot.lane.b32.xlu0 %v815, 16
        %v870 = vpop.permute.xlu0 %869
        %871 = vrot.lane.b32.xlu0 %v818, 16
        %v872 = vpop.permute.xlu0 %871
        %873 = vrot.lane.b32.xlu0 %v821, 16
        %v874 = vpop.permute.xlu0 %873
        %875 = vrot.lane.b32.xlu0 %v824, 16
        %v876 = vpop.permute.xlu0 %875
        %877 = vrot.lane.b32.xlu0 %v827, 16
        %v878 = vpop.permute.xlu0 %877
        %879 = vrot.lane.b32.xlu0 %v830, 16
        %v880 = vpop.permute.xlu0 %879
        %881 = vrot.lane.b32.xlu0 %v833, 16
        %v882 = vpop.permute.xlu0 %881
        %883 = vrot.lane.b32.xlu0 %v836, 16
        %v884 = vpop.permute.xlu0 %883
        %vm909 = vcmask 191616
        %910 = vst.msk [vmem:[#allocation2] sm:$0xf] %vm909, %v838
        %911 = vst.msk [vmem:[#allocation2 + $0x4] sm:$0xf] %vm909, %v840
        %912 = vst.msk [vmem:[#allocation2 + $0x8] sm:$0xf] %vm909, %v842
        %913 = vst.msk [vmem:[#allocation2 + $0xc] sm:$0xf] %vm909, %v844
        %914 = vst.msk [vmem:[#allocation2 + $0x10] sm:$0xf] %vm909, %v846
        %915 = vst.msk [vmem:[#allocation2 + $0x14] sm:$0xf] %vm909, %v848
        %916 = vst.msk [vmem:[#allocation2 + $0x18] sm:$0xf] %vm909, %v850
        %917 = vst.msk [vmem:[#allocation2 + $0x1c] sm:$0xf] %vm909, %v852
        %918 = vst.msk [vmem:[#allocation2 + $0x20] sm:$0xf] %vm909, %v854
        %919 = vst.msk [vmem:[#allocation2 + $0x24] sm:$0xf] %vm909, %v856
        %920 = vst.msk [vmem:[#allocation2 + $0x28] sm:$0xf] %vm909, %v858
        %921 = vst.msk [vmem:[#allocation2 + $0x2c] sm:$0xf] %vm909, %v860
        %922 = vst.msk [vmem:[#allocation2 + $0x30] sm:$0xf] %vm909, %v862
        %923 = vst.msk [vmem:[#allocation2 + $0x34] sm:$0xf] %vm909, %v864
        %924 = vst.msk [vmem:[#allocation2 + $0x38] sm:$0xf] %vm909, %v866
        %925 = vst.msk [vmem:[#allocation2 + $0x3c] sm:$0xf] %vm909, %v868
        %926 = vst.msk [vmem:[#allocation2 + $0x40] sm:$0xf] %vm909, %v870
        %927 = vst.msk [vmem:[#allocation2 + $0x44] sm:$0xf] %vm909, %v872
        %928 = vst.msk [vmem:[#allocation2 + $0x48] sm:$0xf] %vm909, %v874
        %929 = vst.msk [vmem:[#allocation2 + $0x4c] sm:$0xf] %vm909, %v876
        %930 = vst.msk [vmem:[#allocation2 + $0x50] sm:$0xf] %vm909, %v878
        %931 = vst.msk [vmem:[#allocation2 + $0x54] sm:$0xf] %vm909, %v880
        %932 = vst.msk [vmem:[#allocation2 + $0x58] sm:$0xf] %vm909, %v882
        %933 = vst.msk [vmem:[#allocation2 + $0x5c] sm:$0xf] %vm909, %v884
        %v934 = vpack.c.b16 %v339, %v339
        %v935 = vpack.c.b16 %v340, %v340
        %v936 = vrot.slane %v835, 4
        %v937 = vrot.slane %v934, 5
        %v938 = vsel %vm763, %v936, %v937
        %v939 = vrot.slane %v937, 4
        %v940 = vrot.slane %v935, 5
        %v941 = vsel %vm763, %v939, %v940
        %942 = vrot.lane.b32.xlu0 %v773, 24
        %v943 = vpop.permute.xlu0 %942
        %944 = vrot.lane.b32.xlu0 %v776, 24
        %v945 = vpop.permute.xlu0 %944
        %946 = vrot.lane.b32.xlu0 %v779, 24
        %v947 = vpop.permute.xlu0 %946
        %948 = vrot.lane.b32.xlu0 %v782, 24
        %v949 = vpop.permute.xlu0 %948
        %950 = vrot.lane.b32.xlu0 %v785, 24
        %v951 = vpop.permute.xlu0 %950
        %952 = vrot.lane.b32.xlu0 %v788, 24
        %v953 = vpop.permute.xlu0 %952
        %954 = vrot.lane.b32.xlu0 %v791, 24
        %v955 = vpop.permute.xlu0 %954
        %956 = vrot.lane.b32.xlu0 %v794, 24
        %v957 = vpop.permute.xlu0 %956
        %958 = vrot.lane.b32.xlu0 %v797, 24
        %v959 = vpop.permute.xlu0 %958
        %960 = vrot.lane.b32.xlu0 %v800, 24
        %v961 = vpop.permute.xlu0 %960
        %962 = vrot.lane.b32.xlu0 %v803, 24
        %v963 = vpop.permute.xlu0 %962
        %964 = vrot.lane.b32.xlu0 %v806, 24
        %v965 = vpop.permute.xlu0 %964
        %966 = vrot.lane.b32.xlu0 %v809, 24
        %v967 = vpop.permute.xlu0 %966
        %968 = vrot.lane.b32.xlu0 %v812, 24
        %v969 = vpop.permute.xlu0 %968
        %970 = vrot.lane.b32.xlu0 %v815, 24
        %v971 = vpop.permute.xlu0 %970
        %972 = vrot.lane.b32.xlu0 %v818, 24
        %v973 = vpop.permute.xlu0 %972
        %974 = vrot.lane.b32.xlu0 %v821, 24
        %v975 = vpop.permute.xlu0 %974
        %976 = vrot.lane.b32.xlu0 %v824, 24
        %v977 = vpop.permute.xlu0 %976
        %978 = vrot.lane.b32.xlu0 %v827, 24
        %v979 = vpop.permute.xlu0 %978
        %980 = vrot.lane.b32.xlu0 %v830, 24
        %v981 = vpop.permute.xlu0 %980
        %982 = vrot.lane.b32.xlu0 %v833, 24
        %v983 = vpop.permute.xlu0 %982
        %984 = vrot.lane.b32.xlu0 %v836, 24
        %v985 = vpop.permute.xlu0 %984
        %986 = vrot.lane.b32.xlu0 %v938, 24
        %v987 = vpop.permute.xlu0 %986
        %988 = vrot.lane.b32.xlu0 %v941, 24
        %v989 = vpop.permute.xlu0 %988
        %vm1014 = vcmask 257216
        %1015 = vst.msk [vmem:[#allocation2] sm:$0xf] %vm1014, %v943
        %1016 = vst.msk [vmem:[#allocation2 + $0x4] sm:$0xf] %vm1014, %v945
        %1017 = vst.msk [vmem:[#allocation2 + $0x8] sm:$0xf] %vm1014, %v947
        %1018 = vst.msk [vmem:[#allocation2 + $0xc] sm:$0xf] %vm1014, %v949
        %1019 = vst.msk [vmem:[#allocation2 + $0x10] sm:$0xf] %vm1014, %v951
        %1020 = vst.msk [vmem:[#allocation2 + $0x14] sm:$0xf] %vm1014, %v953
        %1021 = vst.msk [vmem:[#allocation2 + $0x18] sm:$0xf] %vm1014, %v955
        %1022 = vst.msk [vmem:[#allocation2 + $0x1c] sm:$0xf] %vm1014, %v957
        %1023 = vst.msk [vmem:[#allocation2 + $0x20] sm:$0xf] %vm1014, %v959
        %1024 = vst.msk [vmem:[#allocation2 + $0x24] sm:$0xf] %vm1014, %v961
        %1025 = vst.msk [vmem:[#allocation2 + $0x28] sm:$0xf] %vm1014, %v963
        %1026 = vst.msk [vmem:[#allocation2 + $0x2c] sm:$0xf] %vm1014, %v965
        %1027 = vst.msk [vmem:[#allocation2 + $0x30] sm:$0xf] %vm1014, %v967
        %1028 = vst.msk [vmem:[#allocation2 + $0x34] sm:$0xf] %vm1014, %v969
        %1029 = vst.msk [vmem:[#allocation2 + $0x38] sm:$0xf] %vm1014, %v971
        %1030 = vst.msk [vmem:[#allocation2 + $0x3c] sm:$0xf] %vm1014, %v973
        %1031 = vst.msk [vmem:[#allocation2 + $0x40] sm:$0xf] %vm1014, %v975
        %1032 = vst.msk [vmem:[#allocation2 + $0x44] sm:$0xf] %vm1014, %v977
        %1033 = vst.msk [vmem:[#allocation2 + $0x48] sm:$0xf] %vm1014, %v979
        %1034 = vst.msk [vmem:[#allocation2 + $0x4c] sm:$0xf] %vm1014, %v981
        %1035 = vst.msk [vmem:[#allocation2 + $0x50] sm:$0xf] %vm1014, %v983
        %1036 = vst.msk [vmem:[#allocation2 + $0x54] sm:$0xf] %vm1014, %v985
        %1037 = vst.msk [vmem:[#allocation2 + $0x58] sm:$0xf] %vm1014, %v987
        %1038 = vst.msk [vmem:[#allocation2 + $0x5c] sm:$0xf] %vm1014, %v989
        %vm1039 = vsmask.f32 2304
        %vm1040 = vsmask.f32 6416
        %vm1041 = vmor %vm1039, %vm1040
        %v1042 = vrot.slane %v444, 5
        %v1043 = vrot.slane %v440, 6
        %v1044 = vor.u32 %v1042, %v1043
        %v1045 = vrot.slane %v1044, 4
        %v1046 = vrot.slane %v454, 5
        %v1047 = vrot.slane %v450, 6
        %v1048 = vor.u32 %v1046, %v1047
        %v1049 = vsel %vm1041, %v1045, %v1048
        %v1050 = vrot.slane %v1048, 4
        %v1051 = vrot.slane %v464, 5
        %v1052 = vrot.slane %v460, 6
        %v1053 = vor.u32 %v1051, %v1052
        %v1054 = vsel %vm1041, %v1050, %v1053
        %v1055 = vrot.slane %v1053, 4
        %v1056 = vrot.slane %v474, 5
        %v1057 = vrot.slane %v470, 6
        %v1058 = vor.u32 %v1056, %v1057
        %v1059 = vsel %vm1041, %v1055, %v1058
        %v1060 = vrot.slane %v1058, 4
        %v1061 = vrot.slane %v484, 5
        %v1062 = vrot.slane %v480, 6
        %v1063 = vor.u32 %v1061, %v1062
        %v1064 = vsel %vm1041, %v1060, %v1063
        %v1065 = vrot.slane %v1063, 4
        %v1066 = vrot.slane %v494, 5
        %v1067 = vrot.slane %v490, 6
        %v1068 = vor.u32 %v1066, %v1067
        %v1069 = vsel %vm1041, %v1065, %v1068
        %v1070 = vrot.slane %v1068, 4
        %v1071 = vrot.slane %v504, 5
        %v1072 = vrot.slane %v500, 6
        %v1073 = vor.u32 %v1071, %v1072
        %v1074 = vsel %vm1041, %v1070, %v1073
        %v1075 = vrot.slane %v1073, 4
        %v1076 = vrot.slane %v514, 5
        %v1077 = vrot.slane %v510, 6
        %v1078 = vor.u32 %v1076, %v1077
        %v1079 = vsel %vm1041, %v1075, %v1078
        %v1080 = vrot.slane %v1078, 4
        %v1081 = vrot.slane %v524, 5
        %v1082 = vrot.slane %v520, 6
        %v1083 = vor.u32 %v1081, %v1082
        %v1084 = vsel %vm1041, %v1080, %v1083
        %v1085 = vrot.slane %v1083, 4
        %v1086 = vrot.slane %v534, 5
        %v1087 = vrot.slane %v530, 6
        %v1088 = vor.u32 %v1086, %v1087
        %v1089 = vsel %vm1041, %v1085, %v1088
        %v1090 = vrot.slane %v1088, 4
        %v1091 = vrot.slane %v544, 5
        %v1092 = vrot.slane %v540, 6
        %v1093 = vor.u32 %v1091, %v1092
        %v1094 = vsel %vm1041, %v1090, %v1093
        %v1095 = vrot.slane %v1093, 4
        %v1096 = vrot.slane %v554, 5
        %v1097 = vrot.slane %v550, 6
        %v1098 = vor.u32 %v1096, %v1097
        %v1099 = vsel %vm1041, %v1095, %v1098
        %v1100 = vrot.slane %v1098, 4
        %v1101 = vrot.slane %v564, 5
        %v1102 = vrot.slane %v560, 6
        %v1103 = vor.u32 %v1101, %v1102
        %v1104 = vsel %vm1041, %v1100, %v1103
        %v1105 = vrot.slane %v1103, 4
        %v1106 = vrot.slane %v574, 5
        %v1107 = vrot.slane %v570, 6
        %v1108 = vor.u32 %v1106, %v1107
        %v1109 = vsel %vm1041, %v1105, %v1108
        %v1110 = vrot.slane %v1108, 4
        %v1111 = vrot.slane %v584, 5
        %v1112 = vrot.slane %v580, 6
        %v1113 = vor.u32 %v1111, %v1112
        %v1114 = vsel %vm1041, %v1110, %v1113
        %v1115 = vrot.slane %v1113, 4
        %v1116 = vrot.slane %v594, 5
        %v1117 = vrot.slane %v590, 6
        %v1118 = vor.u32 %v1116, %v1117
        %v1119 = vsel %vm1041, %v1115, %v1118
        %v1120 = vrot.slane %v1118, 4
        %v1121 = vrot.slane %v604, 5
        %v1122 = vrot.slane %v600, 6
        %v1123 = vor.u32 %v1121, %v1122
        %v1124 = vsel %vm1041, %v1120, %v1123
        %v1125 = vrot.slane %v1123, 4
        %v1126 = vrot.slane %v614, 5
        %v1127 = vrot.slane %v610, 6
        %v1128 = vor.u32 %v1126, %v1127
        %v1129 = vsel %vm1041, %v1125, %v1128
        %v1130 = vrot.slane %v1128, 4
        %v1131 = vrot.slane %v624, 5
        %v1132 = vrot.slane %v620, 6
        %v1133 = vor.u32 %v1131, %v1132
        %v1134 = vsel %vm1041, %v1130, %v1133
        %v1135 = vrot.slane %v1133, 4
        %v1136 = vrot.slane %v634, 5
        %v1137 = vrot.slane %v630, 6
        %v1138 = vor.u32 %v1136, %v1137
        %v1139 = vsel %vm1041, %v1135, %v1138
        %v1140 = vrot.slane %v1138, 4
        %v1141 = vrot.slane %v644, 5
        %v1142 = vrot.slane %v640, 6
        %v1143 = vor.u32 %v1141, %v1142
        %v1144 = vsel %vm1041, %v1140, %v1143
        %v1145 = vrot.slane %v1143, 4
        %v1146 = vrot.slane %v654, 5
        %v1147 = vrot.slane %v650, 6
        %v1148 = vor.u32 %v1146, %v1147
        %v1149 = vsel %vm1041, %v1145, %v1148
        %v1150 = vrot.slane %v1148, 4
        %v1151 = vshrl.u32 %v416, 16
        %v1153 = vrot.slane %v1151, 5
        %v1154 = vrot.slane %v660, 6
        %v1155 = vor.u32 %v1153, %v1154
        %v1156 = vsel %vm1041, %v1150, %v1155
        %v1157 = vrot.slane %v1155, 4
        %v1159 = vshrl.u32 %v934, 16
        %v1161 = vrot.slane %v1159, 5
        %v1162 = vshll.u32 %v934, 16
        %v1164 = vrot.slane %v1162, 6
        %v1165 = vor.u32 %v1161, %v1164
        %v1166 = vsel %vm1041, %v1157, %v1165
        %v1167 = vrot.slane %v1165, 4
        %v1169 = vshrl.u32 %v935, 16
        %v1171 = vrot.slane %v1169, 5
        %v1172 = vshll.u32 %v935, 16
        %v1174 = vrot.slane %v1172, 6
        %v1175 = vor.u32 %v1171, %v1174
        %v1176 = vsel %vm1041, %v1167, %v1175
        %1177 = vrot.lane.b32.xlu0 %v1049, 32
        %v1178 = vpop.permute.xlu0 %1177
        %1179 = vrot.lane.b32.xlu0 %v1054, 32
        %v1180 = vpop.permute.xlu0 %1179
        %1181 = vrot.lane.b32.xlu0 %v1059, 32
        %v1182 = vpop.permute.xlu0 %1181
        %1183 = vrot.lane.b32.xlu0 %v1064, 32
        %v1184 = vpop.permute.xlu0 %1183
        %1185 = vrot.lane.b32.xlu0 %v1069, 32
        %v1186 = vpop.permute.xlu0 %1185
        %1187 = vrot.lane.b32.xlu0 %v1074, 32
        %v1188 = vpop.permute.xlu0 %1187
        %1189 = vrot.lane.b32.xlu0 %v1079, 32
        %v1190 = vpop.permute.xlu0 %1189
        %1191 = vrot.lane.b32.xlu0 %v1084, 32
        %v1192 = vpop.permute.xlu0 %1191
        %1193 = vrot.lane.b32.xlu0 %v1089, 32
        %v1194 = vpop.permute.xlu0 %1193
        %1195 = vrot.lane.b32.xlu0 %v1094, 32
        %v1196 = vpop.permute.xlu0 %1195
        %1197 = vrot.lane.b32.xlu0 %v1099, 32
        %v1198 = vpop.permute.xlu0 %1197
        %1199 = vrot.lane.b32.xlu0 %v1104, 32
        %v1200 = vpop.permute.xlu0 %1199
        %1201 = vrot.lane.b32.xlu0 %v1109, 32
        %v1202 = vpop.permute.xlu0 %1201
        %1203 = vrot.lane.b32.xlu0 %v1114, 32
        %v1204 = vpop.permute.xlu0 %1203
        %1205 = vrot.lane.b32.xlu0 %v1119, 32
        %v1206 = vpop.permute.xlu0 %1205
        %1207 = vrot.lane.b32.xlu0 %v1124, 32
        %v1208 = vpop.permute.xlu0 %1207
        %1209 = vrot.lane.b32.xlu0 %v1129, 32
        %v1210 = vpop.permute.xlu0 %1209
        %1211 = vrot.lane.b32.xlu0 %v1134, 32
        %v1212 = vpop.permute.xlu0 %1211
        %1213 = vrot.lane.b32.xlu0 %v1139, 32
        %v1214 = vpop.permute.xlu0 %1213
        %1215 = vrot.lane.b32.xlu0 %v1144, 32
        %v1216 = vpop.permute.xlu0 %1215
        %1217 = vrot.lane.b32.xlu0 %v1149, 32
        %v1218 = vpop.permute.xlu0 %1217
        %1219 = vrot.lane.b32.xlu0 %v1156, 32
        %v1220 = vpop.permute.xlu0 %1219
        %1221 = vrot.lane.b32.xlu0 %v1166, 32
        %v1222 = vpop.permute.xlu0 %1221
        %1223 = vrot.lane.b32.xlu0 %v1176, 32
        %v1224 = vpop.permute.xlu0 %1223
        %vm1249 = vcmask 322816
        %1250 = vst.msk [vmem:[#allocation2] sm:$0xf] %vm1249, %v1178
        %1251 = vst.msk [vmem:[#allocation2 + $0x4] sm:$0xf] %vm1249, %v1180
        %1252 = vst.msk [vmem:[#allocation2 + $0x8] sm:$0xf] %vm1249, %v1182
        %1253 = vst.msk [vmem:[#allocation2 + $0xc] sm:$0xf] %vm1249, %v1184
        %1254 = vst.msk [vmem:[#allocation2 + $0x10] sm:$0xf] %vm1249, %v1186
        %1255 = vst.msk [vmem:[#allocation2 + $0x14] sm:$0xf] %vm1249, %v1188
        %1256 = vst.msk [vmem:[#allocation2 + $0x18] sm:$0xf] %vm1249, %v1190
        %1257 = vst.msk [vmem:[#allocation2 + $0x1c] sm:$0xf] %vm1249, %v1192
        %1258 = vst.msk [vmem:[#allocation2 + $0x20] sm:$0xf] %vm1249, %v1194
        %1259 = vst.msk [vmem:[#allocation2 + $0x24] sm:$0xf] %vm1249, %v1196
        %1260 = vst.msk [vmem:[#allocation2 + $0x28] sm:$0xf] %vm1249, %v1198
        %1261 = vst.msk [vmem:[#allocation2 + $0x2c] sm:$0xf] %vm1249, %v1200
        %1262 = vst.msk [vmem:[#allocation2 + $0x30] sm:$0xf] %vm1249, %v1202
        %1263 = vst.msk [vmem:[#allocation2 + $0x34] sm:$0xf] %vm1249, %v1204
        %1264 = vst.msk [vmem:[#allocation2 + $0x38] sm:$0xf] %vm1249, %v1206
        %1265 = vst.msk [vmem:[#allocation2 + $0x3c] sm:$0xf] %vm1249, %v1208
        %1266 = vst.msk [vmem:[#allocation2 + $0x40] sm:$0xf] %vm1249, %v1210
        %1267 = vst.msk [vmem:[#allocation2 + $0x44] sm:$0xf] %vm1249, %v1212
        %1268 = vst.msk [vmem:[#allocation2 + $0x48] sm:$0xf] %vm1249, %v1214
        %1269 = vst.msk [vmem:[#allocation2 + $0x4c] sm:$0xf] %vm1249, %v1216
        %1270 = vst.msk [vmem:[#allocation2 + $0x50] sm:$0xf] %vm1249, %v1218
        %1271 = vst.msk [vmem:[#allocation2 + $0x54] sm:$0xf] %vm1249, %v1220
        %1272 = vst.msk [vmem:[#allocation2 + $0x58] sm:$0xf] %vm1249, %v1222
        %1273 = vst.msk [vmem:[#allocation2 + $0x5c] sm:$0xf] %vm1249, %v1224
        %vm1274 = vcmask 1041408
        %vm1275 = vcmask 1045508
        %vm1276 = vmor %vm1274, %vm1275
        %v1277 = vrot.slane %v345, 6
        %v1278 = vrot.slane %v1277, 4
        %v1279 = vrot.slane %v346, 6
        %v1280 = vsel %vm1276, %v1278, %v1279
        %v1281 = vrot.slane %v1279, 4
        %v1282 = vrot.slane %v347, 6
        %v1283 = vsel %vm1276, %v1281, %v1282
        %v1284 = vrot.slane %v1282, 4
        %v1285 = vrot.slane %v348, 6
        %v1286 = vsel %vm1276, %v1284, %v1285
        %v1287 = vrot.slane %v1285, 4
        %v1288 = vrot.slane %v349, 6
        %v1289 = vsel %vm1276, %v1287, %v1288
        %v1290 = vrot.slane %v1288, 4
        %v1291 = vrot.slane %v350, 6
        %v1292 = vsel %vm1276, %v1290, %v1291
        %v1293 = vrot.slane %v1291, 4
        %v1294 = vrot.slane %v351, 6
        %v1295 = vsel %vm1276, %v1293, %v1294
        %v1296 = vrot.slane %v1294, 4
        %v1297 = vrot.slane %v352, 6
        %v1298 = vsel %vm1276, %v1296, %v1297
        %v1299 = vrot.slane %v1297, 4
        %v1300 = vrot.slane %v353, 6
        %v1301 = vsel %vm1276, %v1299, %v1300
        %v1302 = vrot.slane %v1300, 4
        %v1303 = vrot.slane %v354, 6
        %v1304 = vsel %vm1276, %v1302, %v1303
        %v1305 = vrot.slane %v1303, 4
        %v1306 = vrot.slane %v355, 6
        %v1307 = vsel %vm1276, %v1305, %v1306
        %v1308 = vrot.slane %v1306, 4
        %v1309 = vrot.slane %v356, 6
        %v1310 = vsel %vm1276, %v1308, %v1309
        %v1311 = vrot.slane %v1309, 4
        %v1312 = vrot.slane %v357, 6
        %v1313 = vsel %vm1276, %v1311, %v1312
        %v1314 = vrot.slane %v1312, 4
        %v1315 = vrot.slane %v358, 6
        %v1316 = vsel %vm1276, %v1314, %v1315
        %v1317 = vrot.slane %v1315, 4
        %v1318 = vrot.slane %v359, 6
        %v1319 = vsel %vm1276, %v1317, %v1318
        %v1320 = vrot.slane %v1318, 4
        %v1321 = vrot.slane %v360, 6
        %v1322 = vsel %vm1276, %v1320, %v1321
        %v1323 = vrot.slane %v1321, 4
        %v1324 = vrot.slane %v361, 6
        %v1325 = vsel %vm1276, %v1323, %v1324
        %v1326 = vrot.slane %v1324, 4
        %v1327 = vrot.slane %v362, 6
        %v1328 = vsel %vm1276, %v1326, %v1327
        %v1329 = vrot.slane %v1327, 4
        %v1330 = vrot.slane %v363, 6
        %v1331 = vsel %vm1276, %v1329, %v1330
        %v1332 = vrot.slane %v1330, 4
        %v1333 = vrot.slane %v364, 6
        %v1334 = vsel %vm1276, %v1332, %v1333
        %v1335 = vrot.slane %v1333, 4
        %v1336 = vrot.slane %v365, 6
        %v1337 = vsel %vm1276, %v1335, %v1336
        %v1338 = vrot.slane %v1336, 4
        %v1339 = vrot.slane %v366, 6
        %v1340 = vsel %vm1276, %v1338, %v1339
        %v1341 = vrot.slane %v1339, 4
        %v1342 = vrot.slane %v416, 6
        %v1343 = vsel %vm1276, %v1341, %v1342
        %v1344 = vrot.slane %v1342, 4
        %v1345 = vrot.slane %v934, 6
        %v1346 = vsel %vm1276, %v1344, %v1345
        %v1347 = vrot.slane %v1345, 4
        %v1348 = vrot.slane %v935, 6
        %v1349 = vsel %vm1276, %v1347, %v1348
        %1350 = vrot.lane.b32.xlu0 %v1280, 40
        %v1351 = vpop.permute.xlu0 %1350
        %1352 = vrot.lane.b32.xlu0 %v1283, 40
        %v1353 = vpop.permute.xlu0 %1352
        %1354 = vrot.lane.b32.xlu0 %v1286, 40
        %v1355 = vpop.permute.xlu0 %1354
        %1356 = vrot.lane.b32.xlu0 %v1289, 40
        %v1357 = vpop.permute.xlu0 %1356
        %1358 = vrot.lane.b32.xlu0 %v1292, 40
        %v1359 = vpop.permute.xlu0 %1358
        %1360 = vrot.lane.b32.xlu0 %v1295, 40
        %v1361 = vpop.permute.xlu0 %1360
        %1362 = vrot.lane.b32.xlu0 %v1298, 40
        %v1363 = vpop.permute.xlu0 %1362
        %1364 = vrot.lane.b32.xlu0 %v1301, 40
        %v1365 = vpop.permute.xlu0 %1364
        %1366 = vrot.lane.b32.xlu0 %v1304, 40
        %v1367 = vpop.permute.xlu0 %1366
        %1368 = vrot.lane.b32.xlu0 %v1307, 40
        %v1369 = vpop.permute.xlu0 %1368
        %1370 = vrot.lane.b32.xlu0 %v1310, 40
        %v1371 = vpop.permute.xlu0 %1370
        %1372 = vrot.lane.b32.xlu0 %v1313, 40
        %v1373 = vpop.permute.xlu0 %1372
        %1374 = vrot.lane.b32.xlu0 %v1316, 40
        %v1375 = vpop.permute.xlu0 %1374
        %1376 = vrot.lane.b32.xlu0 %v1319, 40
        %v1377 = vpop.permute.xlu0 %1376
        %1378 = vrot.lane.b32.xlu0 %v1322, 40
        %v1379 = vpop.permute.xlu0 %1378
        %1380 = vrot.lane.b32.xlu0 %v1325, 40
        %v1381 = vpop.permute.xlu0 %1380
        %1382 = vrot.lane.b32.xlu0 %v1328, 40
        %v1383 = vpop.permute.xlu0 %1382
        %1384 = vrot.lane.b32.xlu0 %v1331, 40
        %v1385 = vpop.permute.xlu0 %1384
        %1386 = vrot.lane.b32.xlu0 %v1334, 40
        %v1387 = vpop.permute.xlu0 %1386
        %1388 = vrot.lane.b32.xlu0 %v1337, 40
        %v1389 = vpop.permute.xlu0 %1388
        %1390 = vrot.lane.b32.xlu0 %v1340, 40
        %v1391 = vpop.permute.xlu0 %1390
        %1392 = vrot.lane.b32.xlu0 %v1343, 40
        %v1393 = vpop.permute.xlu0 %1392
        %1394 = vrot.lane.b32.xlu0 %v1346, 40
        %v1395 = vpop.permute.xlu0 %1394
        %1396 = vrot.lane.b32.xlu0 %v1349, 40
        %v1397 = vpop.permute.xlu0 %1396
        %vm1422 = vcmask 388416
        %1423 = vst.msk [vmem:[#allocation2] sm:$0xf] %vm1422, %v1351
        %1424 = vst.msk [vmem:[#allocation2 + $0x4] sm:$0xf] %vm1422, %v1353
        %1425 = vst.msk [vmem:[#allocation2 + $0x8] sm:$0xf] %vm1422, %v1355
        %1426 = vst.msk [vmem:[#allocation2 + $0xc] sm:$0xf] %vm1422, %v1357
        %1427 = vst.msk [vmem:[#allocation2 + $0x10] sm:$0xf] %vm1422, %v1359
        %1428 = vst.msk [vmem:[#allocation2 + $0x14] sm:$0xf] %vm1422, %v1361
        %1429 = vst.msk [vmem:[#allocation2 + $0x18] sm:$0xf] %vm1422, %v1363
        %1430 = vst.msk [vmem:[#allocation2 + $0x1c] sm:$0xf] %vm1422, %v1365
        %1431 = vst.msk [vmem:[#allocation2 + $0x20] sm:$0xf] %vm1422, %v1367
        %1432 = vst.msk [vmem:[#allocation2 + $0x24] sm:$0xf] %vm1422, %v1369
        %1433 = vst.msk [vmem:[#allocation2 + $0x28] sm:$0xf] %vm1422, %v1371
        %1434 = vst.msk [vmem:[#allocation2 + $0x2c] sm:$0xf] %vm1422, %v1373
        %1435 = vst.msk [vmem:[#allocation2 + $0x30] sm:$0xf] %vm1422, %v1375
        %1436 = vst.msk [vmem:[#allocation2 + $0x34] sm:$0xf] %vm1422, %v1377
        %1437 = vst.msk [vmem:[#allocation2 + $0x38] sm:$0xf] %vm1422, %v1379
        %1438 = vst.msk [vmem:[#allocation2 + $0x3c] sm:$0xf] %vm1422, %v1381
        %1439 = vst.msk [vmem:[#allocation2 + $0x40] sm:$0xf] %vm1422, %v1383
        %1440 = vst.msk [vmem:[#allocation2 + $0x44] sm:$0xf] %vm1422, %v1385
        %1441 = vst.msk [vmem:[#allocation2 + $0x48] sm:$0xf] %vm1422, %v1387
        %1442 = vst.msk [vmem:[#allocation2 + $0x4c] sm:$0xf] %vm1422, %v1389
        %1443 = vst.msk [vmem:[#allocation2 + $0x50] sm:$0xf] %vm1422, %v1391
        %1444 = vst.msk [vmem:[#allocation2 + $0x54] sm:$0xf] %vm1422, %v1393
        %1445 = vst.msk [vmem:[#allocation2 + $0x58] sm:$0xf] %vm1422, %v1395
        %1446 = vst.msk [vmem:[#allocation2 + $0x5c] sm:$0xf] %vm1422, %v1397
        %v1447 = vpack.c.b16 %v341, %v341
        %v1448 = vpack.c.b16 %v342, %v342
        %v1449 = vrot.slane %v1348, 4
        %v1450 = vrot.slane %v1447, 6
        %v1451 = vsel %vm1276, %v1449, %v1450
        %v1452 = vrot.slane %v1450, 4
        %v1453 = vrot.slane %v1448, 6
        %v1454 = vsel %vm1276, %v1452, %v1453
        %1455 = vrot.lane.b32.xlu0 %v1286, 48
        %v1456 = vpop.permute.xlu0 %1455
        %1457 = vrot.lane.b32.xlu0 %v1289, 48
        %v1458 = vpop.permute.xlu0 %1457
        %1459 = vrot.lane.b32.xlu0 %v1292, 48
        %v1460 = vpop.permute.xlu0 %1459
        %1461 = vrot.lane.b32.xlu0 %v1295, 48
        %v1462 = vpop.permute.xlu0 %1461
        %1463 = vrot.lane.b32.xlu0 %v1298, 48
        %v1464 = vpop.permute.xlu0 %1463
        %1465 = vrot.lane.b32.xlu0 %v1301, 48
        %v1466 = vpop.permute.xlu0 %1465
        %1467 = vrot.lane.b32.xlu0 %v1304, 48
        %v1468 = vpop.permute.xlu0 %1467
        %1469 = vrot.lane.b32.xlu0 %v1307, 48
        %v1470 = vpop.permute.xlu0 %1469
        %1471 = vrot.lane.b32.xlu0 %v1310, 48
        %v1472 = vpop.permute.xlu0 %1471
        %1473 = vrot.lane.b32.xlu0 %v1313, 48
        %v1474 = vpop.permute.xlu0 %1473
        %1475 = vrot.lane.b32.xlu0 %v1316, 48
        %v1476 = vpop.permute.xlu0 %1475
        %1477 = vrot.lane.b32.xlu0 %v1319, 48
        %v1478 = vpop.permute.xlu0 %1477
        %1479 = vrot.lane.b32.xlu0 %v1322, 48
        %v1480 = vpop.permute.xlu0 %1479
        %1481 = vrot.lane.b32.xlu0 %v1325, 48
        %v1482 = vpop.permute.xlu0 %1481
        %1483 = vrot.lane.b32.xlu0 %v1328, 48
        %v1484 = vpop.permute.xlu0 %1483
        %1485 = vrot.lane.b32.xlu0 %v1331, 48
        %v1486 = vpop.permute.xlu0 %1485
        %1487 = vrot.lane.b32.xlu0 %v1334, 48
        %v1488 = vpop.permute.xlu0 %1487
        %1489 = vrot.lane.b32.xlu0 %v1337, 48
        %v1490 = vpop.permute.xlu0 %1489
        %1491 = vrot.lane.b32.xlu0 %v1340, 48
        %v1492 = vpop.permute.xlu0 %1491
        %1493 = vrot.lane.b32.xlu0 %v1343, 48
        %v1494 = vpop.permute.xlu0 %1493
        %1495 = vrot.lane.b32.xlu0 %v1346, 48
        %v1496 = vpop.permute.xlu0 %1495
        %1497 = vrot.lane.b32.xlu0 %v1349, 48
        %v1498 = vpop.permute.xlu0 %1497
        %1499 = vrot.lane.b32.xlu0 %v1451, 48
        %v1500 = vpop.permute.xlu0 %1499
        %1501 = vrot.lane.b32.xlu0 %v1454, 48
        %v1502 = vpop.permute.xlu0 %1501
        %vm1527 = vcmask 454016
        %1528 = vst.msk [vmem:[#allocation2] sm:$0xf] %vm1527, %v1456
        %1529 = vst.msk [vmem:[#allocation2 + $0x4] sm:$0xf] %vm1527, %v1458
        %1530 = vst.msk [vmem:[#allocation2 + $0x8] sm:$0xf] %vm1527, %v1460
        %1531 = vst.msk [vmem:[#allocation2 + $0xc] sm:$0xf] %vm1527, %v1462
        %1532 = vst.msk [vmem:[#allocation2 + $0x10] sm:$0xf] %vm1527, %v1464
        %1533 = vst.msk [vmem:[#allocation2 + $0x14] sm:$0xf] %vm1527, %v1466
        %1534 = vst.msk [vmem:[#allocation2 + $0x18] sm:$0xf] %vm1527, %v1468
        %1535 = vst.msk [vmem:[#allocation2 + $0x1c] sm:$0xf] %vm1527, %v1470
        %1536 = vst.msk [vmem:[#allocation2 + $0x20] sm:$0xf] %vm1527, %v1472
        %1537 = vst.msk [vmem:[#allocation2 + $0x24] sm:$0xf] %vm1527, %v1474
        %1538 = vst.msk [vmem:[#allocation2 + $0x28] sm:$0xf] %vm1527, %v1476
        %1539 = vst.msk [vmem:[#allocation2 + $0x2c] sm:$0xf] %vm1527, %v1478
        %1540 = vst.msk [vmem:[#allocation2 + $0x30] sm:$0xf] %vm1527, %v1480
        %1541 = vst.msk [vmem:[#allocation2 + $0x34] sm:$0xf] %vm1527, %v1482
        %1542 = vst.msk [vmem:[#allocation2 + $0x38] sm:$0xf] %vm1527, %v1484
        %1543 = vst.msk [vmem:[#allocation2 + $0x3c] sm:$0xf] %vm1527, %v1486
        %1544 = vst.msk [vmem:[#allocation2 + $0x40] sm:$0xf] %vm1527, %v1488
        %1545 = vst.msk [vmem:[#allocation2 + $0x44] sm:$0xf] %vm1527, %v1490
        %1546 = vst.msk [vmem:[#allocation2 + $0x48] sm:$0xf] %vm1527, %v1492
        %1547 = vst.msk [vmem:[#allocation2 + $0x4c] sm:$0xf] %vm1527, %v1494
        %1548 = vst.msk [vmem:[#allocation2 + $0x50] sm:$0xf] %vm1527, %v1496
        %1549 = vst.msk [vmem:[#allocation2 + $0x54] sm:$0xf] %vm1527, %v1498
        %1550 = vst.msk [vmem:[#allocation2 + $0x58] sm:$0xf] %vm1527, %v1500
        %1551 = vst.msk [vmem:[#allocation2 + $0x5c] sm:$0xf] %vm1527, %v1502
        %vm1552 = vsmask.f32 1280
        %vm1553 = vsmask.f32 5392
        %vm1554 = vmor %vm1552, %vm1553
        %v1555 = vrot.slane %v464, 6
        %v1556 = vrot.slane %v460, 7
        %v1557 = vor.u32 %v1555, %v1556
        %v1558 = vrot.slane %v1557, 4
        %v1559 = vrot.slane %v474, 6
        %v1560 = vrot.slane %v470, 7
        %v1561 = vor.u32 %v1559, %v1560
        %v1562 = vsel %vm1554, %v1558, %v1561
        %v1563 = vrot.slane %v1561, 4
        %v1564 = vrot.slane %v484, 6
        %v1565 = vrot.slane %v480, 7
        %v1566 = vor.u32 %v1564, %v1565
        %v1567 = vsel %vm1554, %v1563, %v1566
        %v1568 = vrot.slane %v1566, 4
        %v1569 = vrot.slane %v494, 6
        %v1570 = vrot.slane %v490, 7
        %v1571 = vor.u32 %v1569, %v1570
        %v1572 = vsel %vm1554, %v1568, %v1571
        %v1573 = vrot.slane %v1571, 4
        %v1574 = vrot.slane %v504, 6
        %v1575 = vrot.slane %v500, 7
        %v1576 = vor.u32 %v1574, %v1575
        %v1577 = vsel %vm1554, %v1573, %v1576
        %v1578 = vrot.slane %v1576, 4
        %v1579 = vrot.slane %v514, 6
        %v1580 = vrot.slane %v510, 7
        %v1581 = vor.u32 %v1579, %v1580
        %v1582 = vsel %vm1554, %v1578, %v1581
        %v1583 = vrot.slane %v1581, 4
        %v1584 = vrot.slane %v524, 6
        %v1585 = vrot.slane %v520, 7
        %v1586 = vor.u32 %v1584, %v1585
        %v1587 = vsel %vm1554, %v1583, %v1586
        %v1588 = vrot.slane %v1586, 4
        %v1589 = vrot.slane %v534, 6
        %v1590 = vrot.slane %v530, 7
        %v1591 = vor.u32 %v1589, %v1590
        %v1592 = vsel %vm1554, %v1588, %v1591
        %v1593 = vrot.slane %v1591, 4
        %v1594 = vrot.slane %v544, 6
        %v1595 = vrot.slane %v540, 7
        %v1596 = vor.u32 %v1594, %v1595
        %v1597 = vsel %vm1554, %v1593, %v1596
        %v1598 = vrot.slane %v1596, 4
        %v1599 = vrot.slane %v554, 6
        %v1600 = vrot.slane %v550, 7
        %v1601 = vor.u32 %v1599, %v1600
        %v1602 = vsel %vm1554, %v1598, %v1601
        %v1603 = vrot.slane %v1601, 4
        %v1604 = vrot.slane %v564, 6
        %v1605 = vrot.slane %v560, 7
        %v1606 = vor.u32 %v1604, %v1605
        %v1607 = vsel %vm1554, %v1603, %v1606
        %v1608 = vrot.slane %v1606, 4
        %v1609 = vrot.slane %v574, 6
        %v1610 = vrot.slane %v570, 7
        %v1611 = vor.u32 %v1609, %v1610
        %v1612 = vsel %vm1554, %v1608, %v1611
        %v1613 = vrot.slane %v1611, 4
        %v1614 = vrot.slane %v584, 6
        %v1615 = vrot.slane %v580, 7
        %v1616 = vor.u32 %v1614, %v1615
        %v1617 = vsel %vm1554, %v1613, %v1616
        %v1618 = vrot.slane %v1616, 4
        %v1619 = vrot.slane %v594, 6
        %v1620 = vrot.slane %v590, 7
        %v1621 = vor.u32 %v1619, %v1620
        %v1622 = vsel %vm1554, %v1618, %v1621
        %v1623 = vrot.slane %v1621, 4
        %v1624 = vrot.slane %v604, 6
        %v1625 = vrot.slane %v600, 7
        %v1626 = vor.u32 %v1624, %v1625
        %v1627 = vsel %vm1554, %v1623, %v1626
        %v1628 = vrot.slane %v1626, 4
        %v1629 = vrot.slane %v614, 6
        %v1630 = vrot.slane %v610, 7
        %v1631 = vor.u32 %v1629, %v1630
        %v1632 = vsel %vm1554, %v1628, %v1631
        %v1633 = vrot.slane %v1631, 4
        %v1634 = vrot.slane %v624, 6
        %v1635 = vrot.slane %v620, 7
        %v1636 = vor.u32 %v1634, %v1635
        %v1637 = vsel %vm1554, %v1633, %v1636
        %v1638 = vrot.slane %v1636, 4
        %v1639 = vrot.slane %v634, 6
        %v1640 = vrot.slane %v630, 7
        %v1641 = vor.u32 %v1639, %v1640
        %v1642 = vsel %vm1554, %v1638, %v1641
        %v1643 = vrot.slane %v1641, 4
        %v1644 = vrot.slane %v644, 6
        %v1645 = vrot.slane %v640, 7
        %v1646 = vor.u32 %v1644, %v1645
        %v1647 = vsel %vm1554, %v1643, %v1646
        %v1648 = vrot.slane %v1646, 4
        %v1649 = vrot.slane %v654, 6
        %v1650 = vrot.slane %v650, 7
        %v1651 = vor.u32 %v1649, %v1650
        %v1652 = vsel %vm1554, %v1648, %v1651
        %v1653 = vrot.slane %v1651, 4
        %v1654 = vrot.slane %v1151, 6
        %v1655 = vrot.slane %v660, 7
        %v1656 = vor.u32 %v1654, %v1655
        %v1657 = vsel %vm1554, %v1653, %v1656
        %v1658 = vrot.slane %v1656, 4
        %v1659 = vrot.slane %v1159, 6
        %v1660 = vrot.slane %v1162, 7
        %v1661 = vor.u32 %v1659, %v1660
        %v1662 = vsel %vm1554, %v1658, %v1661
        %v1663 = vrot.slane %v1661, 4
        %v1664 = vrot.slane %v1169, 6
        %v1665 = vrot.slane %v1172, 7
        %v1666 = vor.u32 %v1664, %v1665
        %v1667 = vsel %vm1554, %v1663, %v1666
        %v1668 = vrot.slane %v1666, 4
        %v1670 = vshrl.u32 %v1447, 16
        %v1672 = vrot.slane %v1670, 6
        %v1673 = vshll.u32 %v1447, 16
        %v1675 = vrot.slane %v1673, 7
        %v1676 = vor.u32 %v1672, %v1675
        %v1677 = vsel %vm1554, %v1668, %v1676
        %v1678 = vrot.slane %v1676, 4
        %v1680 = vshrl.u32 %v1448, 16
        %v1682 = vrot.slane %v1680, 6
        %v1683 = vshll.u32 %v1448, 16
        %v1685 = vrot.slane %v1683, 7
        %v1686 = vor.u32 %v1682, %v1685
        %v1687 = vsel %vm1554, %v1678, %v1686
        %1688 = vrot.lane.b32.xlu0 %v1562, 56
        %v1689 = vpop.permute.xlu0 %1688
        %1690 = vrot.lane.b32.xlu0 %v1567, 56
        %v1691 = vpop.permute.xlu0 %1690
        %1692 = vrot.lane.b32.xlu0 %v1572, 56
        %v1693 = vpop.permute.xlu0 %1692
        %1694 = vrot.lane.b32.xlu0 %v1577, 56
        %v1695 = vpop.permute.xlu0 %1694
        %1696 = vrot.lane.b32.xlu0 %v1582, 56
        %v1697 = vpop.permute.xlu0 %1696
        %1698 = vrot.lane.b32.xlu0 %v1587, 56
        %v1699 = vpop.permute.xlu0 %1698
        %1700 = vrot.lane.b32.xlu0 %v1592, 56
        %v1701 = vpop.permute.xlu0 %1700
        %1702 = vrot.lane.b32.xlu0 %v1597, 56
        %v1703 = vpop.permute.xlu0 %1702
        %1704 = vrot.lane.b32.xlu0 %v1602, 56
        %v1705 = vpop.permute.xlu0 %1704
        %1706 = vrot.lane.b32.xlu0 %v1607, 56
        %v1707 = vpop.permute.xlu0 %1706
        %1708 = vrot.lane.b32.xlu0 %v1612, 56
        %v1709 = vpop.permute.xlu0 %1708
        %1710 = vrot.lane.b32.xlu0 %v1617, 56
        %v1711 = vpop.permute.xlu0 %1710
        %1712 = vrot.lane.b32.xlu0 %v1622, 56
        %v1713 = vpop.permute.xlu0 %1712
        %1714 = vrot.lane.b32.xlu0 %v1627, 56
        %v1715 = vpop.permute.xlu0 %1714
        %1716 = vrot.lane.b32.xlu0 %v1632, 56
        %v1717 = vpop.permute.xlu0 %1716
        %1718 = vrot.lane.b32.xlu0 %v1637, 56
        %v1719 = vpop.permute.xlu0 %1718
        %1720 = vrot.lane.b32.xlu0 %v1642, 56
        %v1721 = vpop.permute.xlu0 %1720
        %1722 = vrot.lane.b32.xlu0 %v1647, 56
        %v1723 = vpop.permute.xlu0 %1722
        %1724 = vrot.lane.b32.xlu0 %v1652, 56
        %v1725 = vpop.permute.xlu0 %1724
        %1726 = vrot.lane.b32.xlu0 %v1657, 56
        %v1727 = vpop.permute.xlu0 %1726
        %1728 = vrot.lane.b32.xlu0 %v1662, 56
        %v1729 = vpop.permute.xlu0 %1728
        %1730 = vrot.lane.b32.xlu0 %v1667, 56
        %v1731 = vpop.permute.xlu0 %1730
        %1732 = vrot.lane.b32.xlu0 %v1677, 56
        %v1733 = vpop.permute.xlu0 %1732
        %1734 = vrot.lane.b32.xlu0 %v1687, 56
        %v1735 = vpop.permute.xlu0 %1734
        %vm1760 = vcmask 519616
        %1761 = vst.msk [vmem:[#allocation2] sm:$0xf] %vm1760, %v1689
        %1762 = vst.msk [vmem:[#allocation2 + $0x4] sm:$0xf] %vm1760, %v1691
        %1763 = vst.msk [vmem:[#allocation2 + $0x8] sm:$0xf] %vm1760, %v1693
        %1764 = vst.msk [vmem:[#allocation2 + $0xc] sm:$0xf] %vm1760, %v1695
        %1765 = vst.msk [vmem:[#allocation2 + $0x10] sm:$0xf] %vm1760, %v1697
        %1766 = vst.msk [vmem:[#allocation2 + $0x14] sm:$0xf] %vm1760, %v1699
        %1767 = vst.msk [vmem:[#allocation2 + $0x18] sm:$0xf] %vm1760, %v1701
        %1768 = vst.msk [vmem:[#allocation2 + $0x1c] sm:$0xf] %vm1760, %v1703
        %1769 = vst.msk [vmem:[#allocation2 + $0x20] sm:$0xf] %vm1760, %v1705
        %1770 = vst.msk [vmem:[#allocation2 + $0x24] sm:$0xf] %vm1760, %v1707
        %1771 = vst.msk [vmem:[#allocation2 + $0x28] sm:$0xf] %vm1760, %v1709
        %1772 = vst.msk [vmem:[#allocation2 + $0x2c] sm:$0xf] %vm1760, %v1711
        %1773 = vst.msk [vmem:[#allocation2 + $0x30] sm:$0xf] %vm1760, %v1713
        %1774 = vst.msk [vmem:[#allocation2 + $0x34] sm:$0xf] %vm1760, %v1715
        %1775 = vst.msk [vmem:[#allocation2 + $0x38] sm:$0xf] %vm1760, %v1717
        %1776 = vst.msk [vmem:[#allocation2 + $0x3c] sm:$0xf] %vm1760, %v1719
        %1777 = vst.msk [vmem:[#allocation2 + $0x40] sm:$0xf] %vm1760, %v1721
        %1778 = vst.msk [vmem:[#allocation2 + $0x44] sm:$0xf] %vm1760, %v1723
        %1779 = vst.msk [vmem:[#allocation2 + $0x48] sm:$0xf] %vm1760, %v1725
        %1780 = vst.msk [vmem:[#allocation2 + $0x4c] sm:$0xf] %vm1760, %v1727
        %1781 = vst.msk [vmem:[#allocation2 + $0x50] sm:$0xf] %vm1760, %v1729
        %1782 = vst.msk [vmem:[#allocation2 + $0x54] sm:$0xf] %vm1760, %v1731
        %1783 = vst.msk [vmem:[#allocation2 + $0x58] sm:$0xf] %vm1760, %v1733
        %1784 = vst.msk [vmem:[#allocation2 + $0x5c] sm:$0xf] %vm1760, %v1735
        %vm1785 = vcmask 1040384
        %vm1786 = vcmask 1044484
        %vm1787 = vmor %vm1785, %vm1786
        %v1788 = vrot.slane %v347, 7
        %v1789 = vrot.slane %v1788, 4
        %v1790 = vrot.slane %v348, 7
        %v1791 = vsel %vm1787, %v1789, %v1790
        %v1792 = vrot.slane %v1790, 4
        %v1793 = vrot.slane %v349, 7
        %v1794 = vsel %vm1787, %v1792, %v1793
        %v1795 = vrot.slane %v1793, 4
        %v1796 = vrot.slane %v350, 7
        %v1797 = vsel %vm1787, %v1795, %v1796
        %v1798 = vrot.slane %v1796, 4
        %v1799 = vrot.slane %v351, 7
        %v1800 = vsel %vm1787, %v1798, %v1799
        %v1801 = vrot.slane %v1799, 4
        %v1802 = vrot.slane %v352, 7
        %v1803 = vsel %vm1787, %v1801, %v1802
        %v1804 = vrot.slane %v1802, 4
        %v1805 = vrot.slane %v353, 7
        %v1806 = vsel %vm1787, %v1804, %v1805
        %v1807 = vrot.slane %v1805, 4
        %v1808 = vrot.slane %v354, 7
        %v1809 = vsel %vm1787, %v1807, %v1808
        %v1810 = vrot.slane %v1808, 4
        %v1811 = vrot.slane %v355, 7
        %v1812 = vsel %vm1787, %v1810, %v1811
        %v1813 = vrot.slane %v1811, 4
        %v1814 = vrot.slane %v356, 7
        %v1815 = vsel %vm1787, %v1813, %v1814
        %v1816 = vrot.slane %v1814, 4
        %v1817 = vrot.slane %v357, 7
        %v1818 = vsel %vm1787, %v1816, %v1817
        %v1819 = vrot.slane %v1817, 4
        %v1820 = vrot.slane %v358, 7
        %v1821 = vsel %vm1787, %v1819, %v1820
        %v1822 = vrot.slane %v1820, 4
        %v1823 = vrot.slane %v359, 7
        %v1824 = vsel %vm1787, %v1822, %v1823
        %v1825 = vrot.slane %v1823, 4
        %v1826 = vrot.slane %v360, 7
        %v1827 = vsel %vm1787, %v1825, %v1826
        %v1828 = vrot.slane %v1826, 4
        %v1829 = vrot.slane %v361, 7
        %v1830 = vsel %vm1787, %v1828, %v1829
        %v1831 = vrot.slane %v1829, 4
        %v1832 = vrot.slane %v362, 7
        %v1833 = vsel %vm1787, %v1831, %v1832
        %v1834 = vrot.slane %v1832, 4
        %v1835 = vrot.slane %v363, 7
        %v1836 = vsel %vm1787, %v1834, %v1835
        %v1837 = vrot.slane %v1835, 4
        %v1838 = vrot.slane %v364, 7
        %v1839 = vsel %vm1787, %v1837, %v1838
        %v1840 = vrot.slane %v1838, 4
        %v1841 = vrot.slane %v365, 7
        %v1842 = vsel %vm1787, %v1840, %v1841
        %v1843 = vrot.slane %v1841, 4
        %v1844 = vrot.slane %v366, 7
        %v1845 = vsel %vm1787, %v1843, %v1844
        %v1846 = vrot.slane %v1844, 4
        %v1847 = vrot.slane %v416, 7
        %v1848 = vsel %vm1787, %v1846, %v1847
        %v1849 = vrot.slane %v1847, 4
        %v1850 = vrot.slane %v934, 7
        %v1851 = vsel %vm1787, %v1849, %v1850
        %v1852 = vrot.slane %v1850, 4
        %v1853 = vrot.slane %v935, 7
        %v1854 = vsel %vm1787, %v1852, %v1853
        %v1855 = vrot.slane %v1853, 4
        %v1856 = vrot.slane %v1447, 7
        %v1857 = vsel %vm1787, %v1855, %v1856
        %v1858 = vrot.slane %v1856, 4
        %v1859 = vrot.slane %v1448, 7
        %v1860 = vsel %vm1787, %v1858, %v1859
        %1861 = vrot.lane.b32.xlu0 %v1791, 64
        %v1862 = vpop.permute.xlu0 %1861
        %1863 = vrot.lane.b32.xlu0 %v1794, 64
        %v1864 = vpop.permute.xlu0 %1863
        %1865 = vrot.lane.b32.xlu0 %v1797, 64
        %v1866 = vpop.permute.xlu0 %1865
        %1867 = vrot.lane.b32.xlu0 %v1800, 64
        %v1868 = vpop.permute.xlu0 %1867
        %1869 = vrot.lane.b32.xlu0 %v1803, 64
        %v1870 = vpop.permute.xlu0 %1869
        %1871 = vrot.lane.b32.xlu0 %v1806, 64
        %v1872 = vpop.permute.xlu0 %1871
        %1873 = vrot.lane.b32.xlu0 %v1809, 64
        %v1874 = vpop.permute.xlu0 %1873
        %1875 = vrot.lane.b32.xlu0 %v1812, 64
        %v1876 = vpop.permute.xlu0 %1875
        %1877 = vrot.lane.b32.xlu0 %v1815, 64
        %v1878 = vpop.permute.xlu0 %1877
        %1879 = vrot.lane.b32.xlu0 %v1818, 64
        %v1880 = vpop.permute.xlu0 %1879
        %1881 = vrot.lane.b32.xlu0 %v1821, 64
        %v1882 = vpop.permute.xlu0 %1881
        %1883 = vrot.lane.b32.xlu0 %v1824, 64
        %v1884 = vpop.permute.xlu0 %1883
        %1885 = vrot.lane.b32.xlu0 %v1827, 64
        %v1886 = vpop.permute.xlu0 %1885
        %1887 = vrot.lane.b32.xlu0 %v1830, 64
        %v1888 = vpop.permute.xlu0 %1887
        %1889 = vrot.lane.b32.xlu0 %v1833, 64
        %v1890 = vpop.permute.xlu0 %1889
        %1891 = vrot.lane.b32.xlu0 %v1836, 64
        %v1892 = vpop.permute.xlu0 %1891
        %1893 = vrot.lane.b32.xlu0 %v1839, 64
        %v1894 = vpop.permute.xlu0 %1893
        %1895 = vrot.lane.b32.xlu0 %v1842, 64
        %v1896 = vpop.permute.xlu0 %1895
        %1897 = vrot.lane.b32.xlu0 %v1845, 64
        %v1898 = vpop.permute.xlu0 %1897
        %1899 = vrot.lane.b32.xlu0 %v1848, 64
        %v1900 = vpop.permute.xlu0 %1899
        %1901 = vrot.lane.b32.xlu0 %v1851, 64
        %v1902 = vpop.permute.xlu0 %1901
        %1903 = vrot.lane.b32.xlu0 %v1854, 64
        %v1904 = vpop.permute.xlu0 %1903
        %1905 = vrot.lane.b32.xlu0 %v1857, 64
        %v1906 = vpop.permute.xlu0 %1905
        %1907 = vrot.lane.b32.xlu0 %v1860, 64
        %v1908 = vpop.permute.xlu0 %1907
        %vm1933 = vcmask 585216
        %1934 = vst.msk [vmem:[#allocation2] sm:$0xf] %vm1933, %v1862
        %1935 = vst.msk [vmem:[#allocation2 + $0x4] sm:$0xf] %vm1933, %v1864
        %1936 = vst.msk [vmem:[#allocation2 + $0x8] sm:$0xf] %vm1933, %v1866
        %1937 = vst.msk [vmem:[#allocation2 + $0xc] sm:$0xf] %vm1933, %v1868
        %1938 = vst.msk [vmem:[#allocation2 + $0x10] sm:$0xf] %vm1933, %v1870
        %1939 = vst.msk [vmem:[#allocation2 + $0x14] sm:$0xf] %vm1933, %v1872
        %1940 = vst.msk [vmem:[#allocation2 + $0x18] sm:$0xf] %vm1933, %v1874
        %1941 = vst.msk [vmem:[#allocation2 + $0x1c] sm:$0xf] %vm1933, %v1876
        %1942 = vst.msk [vmem:[#allocation2 + $0x20] sm:$0xf] %vm1933, %v1878
        %1943 = vst.msk [vmem:[#allocation2 + $0x24] sm:$0xf] %vm1933, %v1880
        %1944 = vst.msk [vmem:[#allocation2 + $0x28] sm:$0xf] %vm1933, %v1882
        %1945 = vst.msk [vmem:[#allocation2 + $0x2c] sm:$0xf] %vm1933, %v1884
        %1946 = vst.msk [vmem:[#allocation2 + $0x30] sm:$0xf] %vm1933, %v1886
        %1947 = vst.msk [vmem:[#allocation2 + $0x34] sm:$0xf] %vm1933, %v1888
        %1948 = vst.msk [vmem:[#allocation2 + $0x38] sm:$0xf] %vm1933, %v1890
        %1949 = vst.msk [vmem:[#allocation2 + $0x3c] sm:$0xf] %vm1933, %v1892
        %1950 = vst.msk [vmem:[#allocation2 + $0x40] sm:$0xf] %vm1933, %v1894
        %1951 = vst.msk [vmem:[#allocation2 + $0x44] sm:$0xf] %vm1933, %v1896
        %1952 = vst.msk [vmem:[#allocation2 + $0x48] sm:$0xf] %vm1933, %v1898
        %1953 = vst.msk [vmem:[#allocation2 + $0x4c] sm:$0xf] %vm1933, %v1900
        %1954 = vst.msk [vmem:[#allocation2 + $0x50] sm:$0xf] %vm1933, %v1902
        %1955 = vst.msk [vmem:[#allocation2 + $0x54] sm:$0xf] %vm1933, %v1904
        %1956 = vst.msk [vmem:[#allocation2 + $0x58] sm:$0xf] %vm1933, %v1906
        %1957 = vst.msk [vmem:[#allocation2 + $0x5c] sm:$0xf] %vm1933, %v1908
        %v1958 = vld [vmem:[#allocation2] sm:$0xf]
        %v1959 = vld [vmem:[#allocation2 + $0x4] sm:$0xf]
        %v1960 = vld [vmem:[#allocation2 + $0x8] sm:$0xf]
        %v1961 = vld [vmem:[#allocation2 + $0xc] sm:$0xf]
        %v1962 = vld [vmem:[#allocation2 + $0x10] sm:$0xf]
        %v1963 = vld [vmem:[#allocation2 + $0x14] sm:$0xf]
        %v1964 = vld [vmem:[#allocation2 + $0x18] sm:$0xf]
        %v1965 = vld [vmem:[#allocation2 + $0x1c] sm:$0xf]
        %v1966 = vld [vmem:[#allocation2 + $0x20] sm:$0xf]
        %v1967 = vld [vmem:[#allocation2 + $0x24] sm:$0xf]
        %v1968 = vld [vmem:[#allocation2 + $0x28] sm:$0xf]
        %v1969 = vld [vmem:[#allocation2 + $0x2c] sm:$0xf]
        %v1970 = vld [vmem:[#allocation2 + $0x30] sm:$0xf]
        %v1971 = vld [vmem:[#allocation2 + $0x34] sm:$0xf]
        %v1972 = vld [vmem:[#allocation2 + $0x38] sm:$0xf]
        %v1973 = vld [vmem:[#allocation2 + $0x3c] sm:$0xf]
        %v1974 = vld [vmem:[#allocation2 + $0x40] sm:$0xf]
        %v1975 = vld [vmem:[#allocation2 + $0x44] sm:$0xf]
        %v1976 = vld [vmem:[#allocation2 + $0x48] sm:$0xf]
        %v1977 = vld [vmem:[#allocation2 + $0x4c] sm:$0xf]
        %v1978 = vld [vmem:[#allocation2 + $0x50] sm:$0xf]
        %v1979 = vld [vmem:[#allocation2 + $0x54] sm:$0xf]
        %v1980 = vld [vmem:[#allocation2 + $0x58] sm:$0xf]
        %v1981 = vld [vmem:[#allocation2 + $0x5c] sm:$0xf]
        %v1982 = vld [vmem:[%s2] sm:$0xf]
        %v1983 = vld [vmem:[%s2 + $0x4] sm:$0xf]
        %v1984 = vld [vmem:[%s2 + $0x8] sm:$0xf]
        %v1985 = vld [vmem:[%s2 + $0xc] sm:$0xf]
        %v1986 = vld [vmem:[%s2 + $0x10] sm:$0xf]
        %v1987 = vld [vmem:[%s2 + $0x14] sm:$0xf]
        %v1988 = vld [vmem:[%s2 + $0x18] sm:$0xf]
        %v1989 = vld [vmem:[%s2 + $0x1c] sm:$0xf]
        %v1990 = vld [vmem:[%s2 + $0x20] sm:$0xf]
        %v1991 = vld [vmem:[%s3] sm:$0x1]
        %v1993 = vlaneseq
        %v1994 = vshrl.u32 %v1993, 7
        %v1995 = vsub.s32 0, %v1994
        %v1996 = vrot.slane %v1991, %v1995
        %v2022 = vunpack.c.l.b16 %v1958
        %v2023 = vunpack.c.l.b16 %v1959
        %v2024 = vunpack.c.l.b16 %v1960
        %v2025 = vunpack.c.l.b16 %v1961
        %v2026 = vunpack.c.l.b16 %v1962
        %v2027 = vunpack.c.l.b16 %v1963
        %v2028 = vunpack.c.l.b16 %v1964
        %v2029 = vunpack.c.l.b16 %v1965
        %v2030 = vunpack.c.l.b16 %v1966
        %v2031 = vunpack.c.l.b16 %v1967
        %v2032 = vunpack.c.l.b16 %v1968
        %v2033 = vunpack.c.l.b16 %v1969
        %v2034 = vunpack.c.l.b16 %v1970
        %v2035 = vunpack.c.l.b16 %v1971
        %v2036 = vunpack.c.l.b16 %v1972
        %v2037 = vunpack.c.l.b16 %v1973
        %v2038 = vunpack.c.l.b16 %v1974
        %v2039 = vunpack.c.l.b16 %v1975
        %v2040 = vunpack.c.l.b16 %v1976
        %v2041 = vunpack.c.l.b16 %v1977
        %v2042 = vunpack.c.l.b16 %v1978
        %v2043 = vunpack.c.l.b16 %v1979
        %v2044 = vunpack.c.l.b16 %v1980
        %v2045 = vunpack.c.l.b16 %v1981
        %v2046 = vpack.c.b16 %v2023, %v2022
        %v2047 = vpack.c.b16 %v2025, %v2024
        %v2048 = vpack.c.b16 %v2027, %v2026
        %v2049 = vpack.c.b16 %v2029, %v2028
        %v2050 = vpack.c.b16 %v2031, %v2030
        %v2051 = vpack.c.b16 %v2033, %v2032
        %v2052 = vpack.c.b16 %v2035, %v2034
        %v2053 = vpack.c.b16 %v2037, %v2036
        %v2054 = vpack.c.b16 %v2039, %v2038
        %v2055 = vpack.c.b16 %v2041, %v2040
        %v2056 = vpack.c.b16 %v2043, %v2042
        %v2057 = vpack.c.b16 %v2045, %v2044
        %v2067 = vunpack.c.l.b16 %v1982
        %v2068 = vunpack.c.l.b16 %v1983
        %v2069 = vunpack.c.l.b16 %v1984
        %v2070 = vunpack.c.l.b16 %v1985
        %v2071 = vunpack.c.l.b16 %v1986
        %v2072 = vunpack.c.l.b16 %v1987
        %v2073 = vunpack.c.l.b16 %v1988
        %v2074 = vunpack.c.l.b16 %v1989
        %v2075 = vunpack.c.l.b16 %v1990
        %v2076 = vpack.c.b16 %v2068, %v2067
        %v2077 = vpack.c.b16 %v2070, %v2069
        %v2078 = vpack.c.b16 %v2072, %v2071
        %v2079 = vpack.c.b16 %v2074, %v2073
        %v2080 = vpack.c.b16 %v2075, %v2075
        %vm2085 = vcmask 588800
        %v2087 = vsel %vm2085, %v2046, 0
        %v2090 = vsel %vm2085, %v2047, 0
        %v2093 = vsel %vm2085, %v2048, 0
        %v2096 = vsel %vm2085, %v2049, 0
        %v2099 = vsel %vm2085, %v2050, 0
        %v2102 = vsel %vm2085, %v2051, 0
        %v2105 = vsel %vm2085, %v2052, 0
        %v2108 = vsel %vm2085, %v2053, 0
        %v2111 = vsel %vm2085, %v2054, 0
        %v2114 = vsel %vm2085, %v2055, 0
        %v2117 = vsel %vm2085, %v2056, 0
        %v2120 = vsel %vm2085, %v2057, 0
        %vm2122 = vcmask 1043456
        %v2124 = vsel %vm2122, %v2080, 0
        %2126 = vmatprep.subr.bf16.mxu0 0
        %2127 = vmatpush1.bf16.msra.mxu0 0
        %2128 = vmatprep.subr.bf16.mxu0 0
        %2129 = vmatpush1.bf16.msra.mxu0 0
        %2130 = vmatprep.subr.bf16.mxu0 0
        %2131 = vmatpush1.bf16.msra.mxu0 0
        %2132 = vmatprep.subr.bf16.mxu0 0
        %2133 = vmatpush1.bf16.msra.mxu0 %v2124
        %2134 = vmatprep.subr.bf16.mxu0 0
        %2135 = vmatpush1.bf16.msra.mxu0 %v2079
        %2136 = vmatprep.subr.bf16.mxu0 0
        %2137 = vmatpush1.bf16.msra.mxu0 %v2078
        %2138 = vmatprep.subr.bf16.mxu0 0
        %2139 = vmatpush1.bf16.msra.mxu0 %v2077
        %2140 = vmatprep.subr.bf16.mxu0 0
        %2141 = vmatpush1.bf16.msra.mxu0 %v2076
        %2142 = vmatprep.subr.bf16.mxu0 0
        %2143 = vmatpush2.bf16.msra.mxu0 0
        %2144 = vmatprep.subr.bf16.mxu0 0
        %2145 = vmatpush2.bf16.msra.mxu0 0
        %2146 = vmatprep.subr.bf16.mxu0 0
        %2147 = vmatpush2.bf16.msra.mxu0 0
        %2148 = vmatprep.subr.bf16.mxu0 0
        %2149 = vmatpush2.bf16.msra.mxu0 0
        %2150 = vmatprep.subr.bf16.mxu0 0
        %2151 = vmatpush2.bf16.msra.mxu0 0
        %2152 = vmatprep.subr.bf16.mxu0 0
        %2153 = vmatpush2.bf16.msra.mxu0 0
        %2154 = vmatprep.subr.bf16.mxu0 0
        %2155 = vmatpush2.bf16.msra.mxu0 0
        %2156 = vmatprep.subr.bf16.mxu0 0
        %2157 = vmatpush2.bf16.msra.mxu0 0
        %2158 = vmatprep.mubr.bf16.mxu0 0
        %2159 = vmatmul.mubr.bf16.gmra.mxu0 %v2087
        %v2160 = vpop.f32.mrf.mxu0
        %v2161 = vadd.f32 %v1996, %v2160
        %v2162 = vpop.f32.mrf.mxu0
        %v2163 = vpop.f32.mrf.mxu0
        %v2164 = vadd.f32 %v1996, %v2163
        %v2165 = vpop.f32.mrf.mxu0
        %2166 = vmatprep.mubr.bf16.mxu0 0
        %2167 = vmatmul.mubr.bf16.gmra.mxu0 %v2090
        %v2168 = vpop.f32.mrf.mxu0
        %v2169 = vadd.f32 %v1996, %v2168
        %v2170 = vpop.f32.mrf.mxu0
        %v2171 = vpop.f32.mrf.mxu0
        %v2172 = vadd.f32 %v1996, %v2171
        %v2173 = vpop.f32.mrf.mxu0
        %2174 = vmatprep.mubr.bf16.mxu0 0
        %2175 = vmatmul.mubr.bf16.gmra.mxu0 %v2093
        %v2176 = vpop.f32.mrf.mxu0
        %v2177 = vadd.f32 %v1996, %v2176
        %v2178 = vpop.f32.mrf.mxu0
        %v2179 = vpop.f32.mrf.mxu0
        %v2180 = vadd.f32 %v1996, %v2179
        %v2181 = vpop.f32.mrf.mxu0
        %2182 = vmatprep.mubr.bf16.mxu0 0
        %2183 = vmatmul.mubr.bf16.gmra.mxu0 %v2096
        %v2184 = vpop.f32.mrf.mxu0
        %v2185 = vadd.f32 %v1996, %v2184
        %v2186 = vpop.f32.mrf.mxu0
        %v2187 = vpop.f32.mrf.mxu0
        %v2188 = vadd.f32 %v1996, %v2187
        %v2189 = vpop.f32.mrf.mxu0
        %2190 = vmatprep.mubr.bf16.mxu0 0
        %2191 = vmatmul.mubr.bf16.gmra.mxu0 %v2099
        %v2192 = vpop.f32.mrf.mxu0
        %v2193 = vadd.f32 %v1996, %v2192
        %v2194 = vpop.f32.mrf.mxu0
        %v2195 = vpop.f32.mrf.mxu0
        %v2196 = vadd.f32 %v1996, %v2195
        %v2197 = vpop.f32.mrf.mxu0
        %2198 = vmatprep.mubr.bf16.mxu0 0
        %2199 = vmatmul.mubr.bf16.gmra.mxu0 %v2102
        %v2200 = vpop.f32.mrf.mxu0
        %v2201 = vadd.f32 %v1996, %v2200
        %v2202 = vpop.f32.mrf.mxu0
        %v2203 = vpop.f32.mrf.mxu0
        %v2204 = vadd.f32 %v1996, %v2203
        %v2205 = vpop.f32.mrf.mxu0
        %2206 = vmatprep.mubr.bf16.mxu0 0
        %2207 = vmatmul.mubr.bf16.gmra.mxu0 %v2105
        %v2208 = vpop.f32.mrf.mxu0
        %v2209 = vadd.f32 %v1996, %v2208
        %v2210 = vpop.f32.mrf.mxu0
        %v2211 = vpop.f32.mrf.mxu0
        %v2212 = vadd.f32 %v1996, %v2211
        %v2213 = vpop.f32.mrf.mxu0
        %2214 = vmatprep.mubr.bf16.mxu0 0
        %2215 = vmatmul.mubr.bf16.gmra.mxu0 %v2108
        %v2216 = vpop.f32.mrf.mxu0
        %v2217 = vadd.f32 %v1996, %v2216
        %v2218 = vpop.f32.mrf.mxu0
        %v2219 = vpop.f32.mrf.mxu0
        %v2220 = vadd.f32 %v1996, %v2219
        %v2221 = vpop.f32.mrf.mxu0
        %2222 = vmatprep.mubr.bf16.mxu0 0
        %2223 = vmatmul.mubr.bf16.gmra.mxu0 %v2111
        %v2224 = vpop.f32.mrf.mxu0
        %v2225 = vadd.f32 %v1996, %v2224
        %v2226 = vpop.f32.mrf.mxu0
        %v2227 = vpop.f32.mrf.mxu0
        %v2228 = vadd.f32 %v1996, %v2227
        %v2229 = vpop.f32.mrf.mxu0
        %2230 = vmatprep.mubr.bf16.mxu0 0
        %2231 = vmatmul.mubr.bf16.gmra.mxu0 %v2114
        %v2232 = vpop.f32.mrf.mxu0
        %v2233 = vadd.f32 %v1996, %v2232
        %v2234 = vpop.f32.mrf.mxu0
        %v2235 = vpop.f32.mrf.mxu0
        %v2236 = vadd.f32 %v1996, %v2235
        %v2237 = vpop.f32.mrf.mxu0
        %2238 = vmatprep.mubr.bf16.mxu0 0
        %2239 = vmatmul.mubr.bf16.gmra.mxu0 %v2117
        %v2240 = vpop.f32.mrf.mxu0
        %v2241 = vadd.f32 %v1996, %v2240
        %v2242 = vpop.f32.mrf.mxu0
        %v2243 = vpop.f32.mrf.mxu0
        %v2244 = vadd.f32 %v1996, %v2243
        %v2245 = vpop.f32.mrf.mxu0
        %2246 = vmatprep.mubr.bf16.mxu0 0
        %2247 = vmatmul.mubr.bf16.gmra.mxu0 %v2120
        %v2248 = vpop.f32.mrf.mxu0
        %v2249 = vadd.f32 %v1996, %v2248
        %v2250 = vpop.f32.mrf.mxu0
        %v2251 = vpop.f32.mrf.mxu0
        %v2252 = vadd.f32 %v1996, %v2251
        %v2253 = vpop.f32.mrf.mxu0
        %2254 = vdwg.mxu0
        %v2255 = vmax.f32 %v2161, 0.0
        %v2256 = vmax.f32 %v2164, 0.0
        %v2257 = vmax.f32 %v2169, 0.0
        %v2258 = vmax.f32 %v2172, 0.0
        %v2259 = vmax.f32 %v2177, 0.0
        %v2260 = vmax.f32 %v2180, 0.0
        %v2261 = vmax.f32 %v2185, 0.0
        %v2262 = vmax.f32 %v2188, 0.0
        %v2263 = vmax.f32 %v2193, 0.0
        %v2264 = vmax.f32 %v2196, 0.0
        %v2265 = vmax.f32 %v2201, 0.0
        %v2266 = vmax.f32 %v2204, 0.0
        %v2267 = vmax.f32 %v2209, 0.0
        %v2268 = vmax.f32 %v2212, 0.0
        %v2269 = vmax.f32 %v2217, 0.0
        %v2270 = vmax.f32 %v2220, 0.0
        %v2271 = vmax.f32 %v2225, 0.0
        %v2272 = vmax.f32 %v2228, 0.0
        %v2273 = vmax.f32 %v2233, 0.0
        %v2274 = vmax.f32 %v2236, 0.0
        %v2275 = vmax.f32 %v2241, 0.0
        %v2276 = vmax.f32 %v2244, 0.0
        %v2277 = vmax.f32 %v2249, 0.0
        %v2278 = vmax.f32 %v2252, 0.0
        %v2279 = vpack.c.bf16 %v2256, %v2255
        %v2280 = vpack.c.bf16 %v2258, %v2257
        %v2281 = vpack.c.bf16 %v2260, %v2259
        %v2282 = vpack.c.bf16 %v2262, %v2261
        %v2283 = vpack.c.bf16 %v2264, %v2263
        %v2284 = vpack.c.bf16 %v2266, %v2265
        %v2285 = vpack.c.bf16 %v2268, %v2267
        %v2286 = vpack.c.bf16 %v2270, %v2269
        %v2287 = vpack.c.bf16 %v2272, %v2271
        %v2288 = vpack.c.bf16 %v2274, %v2273
        %v2289 = vpack.c.bf16 %v2276, %v2275
        %v2290 = vpack.c.bf16 %v2278, %v2277
        %v2303 = vunpack.c.l.b16 %v2279
        %v2304 = vunpack.c.h.b16 %v2279
        %v2305 = vunpack.c.l.b16 %v2280
        %v2306 = vunpack.c.h.b16 %v2280
        %v2307 = vunpack.c.l.b16 %v2281
        %v2308 = vunpack.c.h.b16 %v2281
        %v2309 = vunpack.c.l.b16 %v2282
        %v2310 = vunpack.c.h.b16 %v2282
        %v2311 = vunpack.c.l.b16 %v2283
        %v2312 = vunpack.c.h.b16 %v2283
        %v2313 = vunpack.c.l.b16 %v2284
        %v2314 = vunpack.c.h.b16 %v2284
        %v2315 = vunpack.c.l.b16 %v2285
        %v2316 = vunpack.c.h.b16 %v2285
        %v2317 = vunpack.c.l.b16 %v2286
        %v2318 = vunpack.c.h.b16 %v2286
        %v2319 = vunpack.c.l.b16 %v2287
        %v2320 = vunpack.c.h.b16 %v2287
        %v2321 = vunpack.c.l.b16 %v2288
        %v2322 = vunpack.c.h.b16 %v2288
        %v2323 = vunpack.c.l.b16 %v2289
        %v2324 = vunpack.c.h.b16 %v2289
        %v2325 = vunpack.c.l.b16 %v2290
        %v2326 = vunpack.c.h.b16 %v2290
        %v2327 = vpack.c.b16 %v2303, %v2303
        %v2328 = vpack.c.b16 %v2304, %v2304
        %v2329 = vpack.c.b16 %v2305, %v2305
        %v2330 = vpack.c.b16 %v2306, %v2306
        %v2331 = vpack.c.b16 %v2307, %v2307
        %v2332 = vpack.c.b16 %v2308, %v2308
        %v2333 = vpack.c.b16 %v2309, %v2309
        %v2334 = vpack.c.b16 %v2310, %v2310
        %v2335 = vpack.c.b16 %v2311, %v2311
        %v2336 = vpack.c.b16 %v2312, %v2312
        %v2337 = vpack.c.b16 %v2313, %v2313
        %v2338 = vpack.c.b16 %v2314, %v2314
        %v2339 = vpack.c.b16 %v2315, %v2315
        %v2340 = vpack.c.b16 %v2316, %v2316
        %v2341 = vpack.c.b16 %v2317, %v2317
        %v2342 = vpack.c.b16 %v2318, %v2318
        %v2343 = vpack.c.b16 %v2319, %v2319
        %v2344 = vpack.c.b16 %v2320, %v2320
        %v2345 = vpack.c.b16 %v2321, %v2321
        %v2346 = vpack.c.b16 %v2322, %v2322
        %v2347 = vpack.c.b16 %v2323, %v2323
        %v2348 = vpack.c.b16 %v2324, %v2324
        %v2349 = vpack.c.b16 %v2325, %v2325
        %v2350 = vpack.c.b16 %v2326, %v2326
        %2375 = vst [vmem:[%s229] sm:$0xf] %v2327
        %2376 = vst [vmem:[%s229 + $0x4] sm:$0xf] %v2328
        %2377 = vst [vmem:[%s229 + $0x8] sm:$0xf] %v2329
        %2378 = vst [vmem:[%s229 + $0xc] sm:$0xf] %v2330
        %2379 = vst [vmem:[%s229 + $0x10] sm:$0xf] %v2331
        %2380 = vst [vmem:[%s229 + $0x14] sm:$0xf] %v2332
        %2381 = vst [vmem:[%s229 + $0x18] sm:$0xf] %v2333
        %2382 = vst [vmem:[%s229 + $0x1c] sm:$0xf] %v2334
        %2383 = vst [vmem:[%s229 + $0x20] sm:$0xf] %v2335
        %2384 = vst [vmem:[%s229 + $0x24] sm:$0xf] %v2336
        %2385 = vst [vmem:[%s229 + $0x28] sm:$0xf] %v2337
        %2386 = vst [vmem:[%s229 + $0x2c] sm:$0xf] %v2338
        %2387 = vst [vmem:[%s229 + $0x30] sm:$0xf] %v2339
        %2388 = vst [vmem:[%s229 + $0x34] sm:$0xf] %v2340
        %2389 = vst [vmem:[%s229 + $0x38] sm:$0xf] %v2341
        %2390 = vst [vmem:[%s229 + $0x3c] sm:$0xf] %v2342
        %2391 = vst [vmem:[%s229 + $0x40] sm:$0xf] %v2343
        %2392 = vst [vmem:[%s229 + $0x44] sm:$0xf] %v2344
        %2393 = vst [vmem:[%s229 + $0x48] sm:$0xf] %v2345
        %2394 = vst [vmem:[%s229 + $0x4c] sm:$0xf] %v2346
        %2395 = vst [vmem:[%s229 + $0x50] sm:$0xf] %v2347
        %2396 = vst [vmem:[%s229 + $0x54] sm:$0xf] %v2348
        %2397 = vst [vmem:[%s229 + $0x58] sm:$0xf] %v2349
        %2398 = vst [vmem:[%s229 + $0x5c] sm:$0xf] %v2350
        %s2399 = sand.u32 %s124, 1
        %s2400 = scalar_lea.sflag [#allocation4], %s2399
        %s2401 = sand.u32 %s124, 1
        %s2402 = smul.addr %s2401, 96
        %s2403 = scalar_lea.vmem [#allocation3], %s2402
        // Predicated region
        $region37: #{tpu_custom_call.1} parent=35 // pred_check
          %p2404 = pneg %p134
        $region38: #{tpu_custom_call.1} parent=35 // pred_check_branch
          %2406 = sbr.rel (%p2404) target = $region40
        $region39: #{tpu_custom_call.1} parent=35 // pred_region
          %s2407 = smul.u32 24, %s18
          %s2409 = ssub.s32 1536, 1536
          %2410 = vsyncadd %s2400, %s2409
          %s2411 = smul.addr %s2407, 64
          %s2412 = scalar_lea.hbm %s4, %s2411
          %s2413 = sshll.u32 %s2403, 4
          %s2414 = int_to_ptr.vmem [resolvable:$true] %s2413
          %2419 = dma.vmem_to_hbm [thread:$0]  %s2414, 1536, %s2412, %s2400, 64, 64, 4
        $region40: #{tpu_custom_call.1} parent=35 // pred_fallthru
          _
      $region36: #{tpu_custom_call.1} parent=5 // pred_fallthru
        _
      %p2420 = scmp.le.s32.totalorder 2, %s13
      // Predicated region
      $region41: #{tpu_custom_call.1} parent=5 // pred_check
        %p2421 = pneg %p2420
      $region42: #{tpu_custom_call.1} parent=5 // pred_check_branch
        %2423 = sbr.rel (%p2421) target = $region44
      $region43: #{tpu_custom_call.1} parent=5 // pred_region
        %s2424 = ssub.s32 %s13, 2
        // Predicated region
        $region45: #{tpu_custom_call.1} parent=43 // pred_check
          %p2425 = pneg %p140
        $region46: #{tpu_custom_call.1} parent=43 // pred_check_branch
          %2427 = sbr.rel (%p2425) target = $region48
        $region47: #{tpu_custom_call.1} parent=43 // pred_region
          %s2428 = sand.u32 %s125, 1
          %s2429 = scalar_lea.sflag [#allocation4], %s2428
          %s2430 = sand.u32 %s125, 1
          %s2431 = smul.addr %s2430, 96
          %s2432 = scalar_lea.vmem [#allocation3], %s2431
          %2433 = dma.done %s2429, 1536
        $region48: #{tpu_custom_call.1} parent=43 // pred_fallthru
          _
      $region44: #{tpu_custom_call.1} parent=5 // pred_fallthru
        _
    $region6: #{tpu_custom_call.1} parent=1 // loop_footer
      %s17 = sadd.s32 1, %s13
    $region7: #{tpu_custom_call.1} parent=1 // loop_footer_branch
      %12 = sbr.rel target = $region3
    $region8: #{tpu_custom_call.1} parent=1 // loop_exit
      _
    %2434 = vsyncpa [#allocation4], 1
    %s2435 = scalar_lea.sflag [#allocation4], 1
    %2436 = vsyncpa %s2435, 1

</llo_original>
